<compile_context>
chip_gen: v7x
topology: tpu7x:2x2x1
jax: 0.10.0
libtpu: 0.0.40
codegen_flags: <defaults>
</compile_context>

<pallas_src>
import functools

import jax
import jax.numpy as jnp
from jax import lax
from jax.experimental import pallas as pl
from jax.experimental.pallas import tpu as pltpu


def _round_up(x, m):
    return ((x + m - 1) // m) * m


def _eup_has_bf16():
    """True on chips with a bf16 EUP/VPU path (v6e, v7x); False on <= v5."""
    try:
        kind = jax.devices()[0].device_kind.lower()
    except Exception:
        return True
    return not any(tag in kind for tag in ("v2", "v3", "v4", "v5"))


def _vpu_linear(h, w, b):
    """y = w @ h + b for ultra-narrow layers, as VPU broadcast-FMAs.

    h: (K, Nt) f32, w: (O, K) f32 with K, O <= 9, b: (O, 1) f32 -> (O, Nt) f32.
    Keeps these layers off the MXU (they would otherwise pay a full systolic
    fill + drain while occupying <1% of an MXU tile).
    """
    k_dim = w.shape[1]
    acc = w[:, 0:1] * h[0:1, :]
    for k in range(1, k_dim):
        acc = acc + w[:, k:k + 1] * h[k:k + 1, :]
    return acc + b


def qnet_big_kernel(
    x_ref,
    w1_ref, b1_ref,
    w2_ref, b2_ref,
    w3_ref, b3_ref,
    w4_ref, b4_ref,
    w5_ref, b5_ref,
    w6_ref, b6_ref,
    wfc_ref, bfc_ref,
    o_ref,
    *,
    total_n,
    block_n,
    act_dtype,
):
    """Whole MLP (6 tanh Linears + final Linear) for one batch tile."""
    f32 = jnp.float32

    # Natural (batch_tile, D) input -- no host transpose/pad.  Mask rows past
    # the true batch size (partial last block would otherwise read undefined
    # data; masking keeps pad lanes at finite zeros).
    x = x_ref[...].astype(f32)
    if total_n % block_n != 0:
        rows = lax.broadcasted_iota(jnp.int32, x.shape, 0)
        n_valid = total_n - pl.program_id(0) * block_n
        x = jnp.where(rows < n_valid, x, 0.0)

    # Layer 1 (D -> 3): contract D directly (A @ B^T); folds the
    # (batch, D) -> (features, batch) layout flip into the matmul.  f32:
    # raw, unbounded inputs.
    y = lax.dot_general(
        w1_ref[...], x, (((1,), (1,)), ((), ())), preferred_element_type=f32
    ) + b1_ref[...]
    h = jnp.tanh(y)                                            # (3,   Nt) f32

    # Layer 2 (3 -> 9): too narrow for the MXU -> VPU broadcast-FMA, f32.
    h = _vpu_linear(h, w2_ref[...], b2_ref[...])
    h = jnp.tanh(h.astype(act_dtype))                          # (9,   Nt)

    def mxu_layer(h, w_ref, b_ref, out_dtype):
        w = w_ref[...]                     # pre-cast (bf16 in production path)
        y = jnp.dot(w, h.astype(w.dtype), preferred_element_type=f32) + b_ref[...]
        return jnp.tanh(y.astype(out_dtype))

    h = mxu_layer(h, w3_ref, b3_ref, act_dtype)                # (64,  Nt)
    h = mxu_layer(h, w4_ref, b4_ref, act_dtype)                # (256, Nt) 233 padded
    h = mxu_layer(h, w5_ref, b5_ref, act_dtype)                # (64,  Nt)
    h = mxu_layer(h, w6_ref, b6_ref, f32)                      # (9,   Nt) feeds VPU FC

    # FC (9 -> 1): VPU, f32; lane-dense (1, Nt) store.
    out = _vpu_linear(h, wfc_ref[...], bfc_ref[...])
    o_ref[...] = out.astype(o_ref.dtype)


_MXU_LAYERS = (2, 3, 4, 5)   # w3, w4, w5, w6 -- the only layers worth the MXU


def _prep_params(params, *, use_bf16, pad_to=256):
    """PyTorch-layout params -> kernel layout.

    Weights stay (out, in); biases become (out, 1) f32 columns; the 64->233 /
    233->64 pair is zero-padded to 256; MXU-layer weights are pre-cast to bf16
    when use_bf16 so no per-grid-step cast happens inside the kernel.
    """
    (w1, b1), (w2, b2), (w3, b3), (w4, b4), (w5, b5), (w6, b6), (wfc, bfc) = params
    pad = pad_to - w4.shape[0]
    if pad > 0:
        w4 = jnp.pad(w4, ((0, pad), (0, 0)))
        b4 = jnp.pad(b4, ((0, pad),))
        w5 = jnp.pad(w5, ((0, 0), (0, pad)))
    mxu_dtype = jnp.bfloat16 if use_bf16 else jnp.float32
    prepped = []
    for idx, (w, b) in enumerate(
        [(w1, b1), (w2, b2), (w3, b3), (w4, b4), (w5, b5), (w6, b6), (wfc, bfc)]
    ):
        w_dtype = mxu_dtype if idx in _MXU_LAYERS else jnp.float32
        prepped.append((w.astype(w_dtype), b.reshape(-1, 1).astype(jnp.float32)))
    return prepped


def qnet_big_forward(x, params, *, block_n=2048, use_bf16=True, bf16_tanh=None):
    """x: (N, D) float32, params in PyTorch Linear layout.  Returns (1, N).

    block_n:   batch-tile width on the lane axis (multiple of 128).  On v7x
               choose it so the number of tiles is even (2 TensorCores).
    use_bf16:  bf16 MXU operands for the 64<->256 layers (f32 accumulation).
    bf16_tanh: run tanh in bf16 on the EUP; default auto (on v6e/v7x, off v5e).
    """
    N, D = x.shape
    block_n = min(block_n, _round_up(N, 128))
    assert block_n % 128 == 0, "block_n must be a multiple of 128 (lane width)"
    n_blocks = pl.cdiv(N, block_n)

    if bf16_tanh is None:
        bf16_tanh = use_bf16 and _eup_has_bf16()
    act_dtype = jnp.bfloat16 if (use_bf16 and bf16_tanh) else jnp.float32

    kparams = _prep_params(params, use_bf16=use_bf16)
    flat_params = [a for wb in kparams for a in wb]

    def rep_spec(arr):
        nd = arr.ndim
        return pl.BlockSpec(arr.shape, lambda i, _nd=nd: (0,) * _nd)

    in_specs = [pl.BlockSpec((block_n, D), lambda i: (i, 0))]   # natural x layout
    for w, b in kparams:
        in_specs.append(rep_spec(w))
        in_specs.append(rep_spec(b))
    out_spec = pl.BlockSpec((1, block_n), lambda i: (0, i))     # lane-dense row

    # Advisory cost estimate (helps XLA schedule around the fused MLP).
    mac = sum(int(w.shape[0]) * int(w.shape[1]) for w, _ in kparams)
    tanh_feats = sum(int(w.shape[0]) for w, _ in kparams[:-1])
    param_bytes = sum(int(w.size) * w.dtype.itemsize + int(b.size) * 4
                      for w, b in kparams)
    cost = pl.CostEstimate(
        flops=2 * N * mac,
        transcendentals=N * tanh_feats,
        bytes_accessed=4 * N * (D + 1) + param_bytes,
    )

    # Explicit VMEM budget: activations per lane-column (f32 + bf16 shadows),
    # the lane-padded x tile, plus margin; clamped so v5e's 16 MiB scoped
    # default never binds while staying far below physical VMEM everywhere.
    feat_total = D + 3 + 9 + 64 + 256 + 64 + 9 + 1
    need = 6 * feat_total * block_n + 2 * (block_n // 8) * 4096 + (2 << 20)
    vmem_limit = int(min(max(need, 32 << 20), 100 << 20))

    out = pl.pallas_call(
        functools.partial(
            qnet_big_kernel, total_n=N, block_n=block_n, act_dtype=act_dtype
        ),
        out_shape=jax.ShapeDtypeStruct((1, N), jnp.float32),
        grid_spec=pltpu.PrefetchScalarGridSpec(
            num_scalar_prefetch=0,
            grid=(n_blocks,),
            in_specs=in_specs,
            out_specs=out_spec,
        ),
        compiler_params=pltpu.CompilerParams(
            dimension_semantics=("parallel",),
            vmem_limit_bytes=vmem_limit,
        ),
        cost_estimate=cost,
    )(x.astype(jnp.float32), *flat_params)

    # Output is already (1, N) == squeeze(-1).unsqueeze(0); partial last tile
    # is handled by Pallas (out-of-range lanes are never written back).
    return out


def init_params(key, d_in):
    """Xavier-normal weights (out, in) + small random biases, PyTorch Linear layout."""
    dims = [d_in, 3, 9, 64, 233, 64, 9, 1]
    params = []
    for i in range(len(dims) - 1):
        fan_in, fan_out = dims[i], dims[i + 1]
        key, wk, bk = jax.random.split(key, 3)
        std = (2.0 / (fan_in + fan_out)) ** 0.5
        w = std * jax.random.normal(wk, (fan_out, fan_in), dtype=jnp.float32)
        b = 0.1 * jax.random.normal(bk, (fan_out,), dtype=jnp.float32)
        params.append((w, b))
    return params


def reference_forward(x, params):
    """Pure-JAX reference identical to the PyTorch forward."""
    h = x
    for i, (w, b) in enumerate(params):
        h = h @ w.T + b
        if i < len(params) - 1:
            h = jnp.tanh(h)
    return h[..., 0][None, :]  # squeeze(-1).unsqueeze(0)


if __name__ == "__main__":
    # Small shapes consistent with the module: nT=3, nM=4 -> D = nT + nM + 1 = 8.
    nT, nM = 3, 4
    D = nT + nM + 1
    N = 300  # not a multiple of 128 on purpose: exercises partial-tile masking

    key = jax.random.PRNGKey(0)
    key, xk = jax.random.split(key)
    x = jax.random.normal(xk, (N, D), dtype=jnp.float32)
    params = init_params(key, D)

    ref = reference_forward(x, params)

    # Exact-precision path (f32 MXU operands), multi-block grid + partial tile.
    out_f32 = jax.block_until_ready(
        qnet_big_forward(x, params, block_n=128, use_bf16=False))
    assert out_f32.shape == (1, N), out_f32.shape
    err_f32 = float(jnp.max(jnp.abs(out_f32 - ref)))
    assert err_f32 < 1e-5, f"f32 path error too large: {err_f32}"

    # Production path: bf16 MXU operands (f32 accumulation), default tiling.
    out_bf16 = jax.block_until_ready(qnet_big_forward(x, params))
    assert out_bf16.shape == (1, N), out_bf16.shape
    err_bf16 = float(jnp.max(jnp.abs(out_bf16 - ref)))
    assert err_bf16 < 5e-2, f"bf16 path error too large: {err_bf16}"

    print("KERNEL_OK")
</pallas_src>

<mosaic_0001>
module attributes {stable_mosaic.version = 11 : i64} {
  func.func @qnet_big_kernel(%arg0: i32, %arg1: memref<128x8xf32, #tpu.memory_space<vmem>>, %arg2: memref<3x8xf32, #tpu.memory_space<vmem>>, %arg3: memref<3x1xf32, #tpu.memory_space<vmem>>, %arg4: memref<9x3xf32, #tpu.memory_space<vmem>>, %arg5: memref<9x1xf32, #tpu.memory_space<vmem>>, %arg6: memref<64x9xf32, #tpu.memory_space<vmem>>, %arg7: memref<64x1xf32, #tpu.memory_space<vmem>>, %arg8: memref<256x64xf32, #tpu.memory_space<vmem>>, %arg9: memref<256x1xf32, #tpu.memory_space<vmem>>, %arg10: memref<64x256xf32, #tpu.memory_space<vmem>>, %arg11: memref<64x1xf32, #tpu.memory_space<vmem>>, %arg12: memref<9x64xf32, #tpu.memory_space<vmem>>, %arg13: memref<9x1xf32, #tpu.memory_space<vmem>>, %arg14: memref<1x9xf32, #tpu.memory_space<vmem>>, %arg15: memref<1x1xf32, #tpu.memory_space<vmem>>, %arg16: memref<1x128xf32, #tpu.memory_space<vmem>>) attributes {dimension_semantics = [#tpu.dimension_semantics<parallel>], iteration_bounds = array<i64: 3>, scalar_prefetch = 0 : i64, scratch_operands = 0 : i64, tpu.core_type = #tpu.core_type<tc>, window_params = [{transform_indices = @transform_0, window_bounds = array<i64: 128, 8>}, {pipeline_mode = #tpu.pipeline_mode<synchronous>, transform_indices = @transform_1, window_bounds = array<i64: 3, 8>}, {pipeline_mode = #tpu.pipeline_mode<synchronous>, transform_indices = @transform_2, window_bounds = array<i64: 3, 1>}, {pipeline_mode = #tpu.pipeline_mode<synchronous>, transform_indices = @transform_3, window_bounds = array<i64: 9, 3>}, {pipeline_mode = #tpu.pipeline_mode<synchronous>, transform_indices = @transform_4, window_bounds = array<i64: 9, 1>}, {pipeline_mode = #tpu.pipeline_mode<synchronous>, transform_indices = @transform_5, window_bounds = array<i64: 64, 9>}, {pipeline_mode = #tpu.pipeline_mode<synchronous>, transform_indices = @transform_6, window_bounds = array<i64: 64, 1>}, {pipeline_mode = #tpu.pipeline_mode<synchronous>, transform_indices = @transform_7, window_bounds = array<i64: 256, 64>}, {pipeline_mode = #tpu.pipeline_mode<synchronous>, transform_indices = @transform_8, window_bounds = array<i64: 256, 1>}, {pipeline_mode = #tpu.pipeline_mode<synchronous>, transform_indices = @transform_9, window_bounds = array<i64: 64, 256>}, {pipeline_mode = #tpu.pipeline_mode<synchronous>, transform_indices = @transform_10, window_bounds = array<i64: 64, 1>}, {pipeline_mode = #tpu.pipeline_mode<synchronous>, transform_indices = @transform_11, window_bounds = array<i64: 9, 64>}, {pipeline_mode = #tpu.pipeline_mode<synchronous>, transform_indices = @transform_12, window_bounds = array<i64: 9, 1>}, {pipeline_mode = #tpu.pipeline_mode<synchronous>, transform_indices = @transform_13, window_bounds = array<i64: 1, 9>}, {pipeline_mode = #tpu.pipeline_mode<synchronous>, transform_indices = @transform_14, window_bounds = array<i64: 1, 1>}, {transform_indices = @transform_15, window_bounds = array<i64: 1, 128>}]} {
    %c0 = arith.constant 0 : index
    %c0_0 = arith.constant 0 : index
    %0 = vector.load %arg1[%c0, %c0_0] : memref<128x8xf32, #tpu.memory_space<vmem>>, vector<128x8xf32>
    %1 = tpu.iota {dimensions = array<i32: 0>} : vector<128x8xi32>
    %c128_i32 = arith.constant 128 : i32
    %2 = arith.muli %arg0, %c128_i32 : i32
    %c300_i32 = arith.constant 300 : i32
    %3 = arith.subi %c300_i32, %2 : i32
    %4 = vector.broadcast %3 : i32 to vector<128x8xi32>
    %5 = arith.cmpi slt, %1, %4 : vector<128x8xi32>
    %cst = arith.constant 0.000000e+00 : f32
    %6 = vector.broadcast %cst : f32 to vector<128x8xf32>
    %7 = arith.select %5, %0, %6 : vector<128x8xi1>, vector<128x8xf32>
    %c0_1 = arith.constant 0 : index
    %c0_2 = arith.constant 0 : index
    %8 = vector.load %arg2[%c0_1, %c0_2] : memref<3x8xf32, #tpu.memory_space<vmem>>, vector<3x8xf32>
    %cst_3 = arith.constant dense<0.000000e+00> : vector<3x128xf32>
    %9 = tpu.matmul %8, %7, %cst_3 {dimension_numbers = #tpu.dot_dimension_numbers<[1], [1], [0], [0], [0, 0, 1, 0], [], []>} : vector<3x8xf32>, vector<128x8xf32>, vector<3x128xf32> -> vector<3x128xf32>
    %c0_4 = arith.constant 0 : index
    %c0_5 = arith.constant 0 : index
    %10 = vector.load %arg3[%c0_4, %c0_5] : memref<3x1xf32, #tpu.memory_space<vmem>>, vector<3x1xf32>
    %11 = vector.broadcast %10 : vector<3x1xf32> to vector<3x128xf32>
    %12 = arith.addf %9, %11 : vector<3x128xf32>
    %13 = math.tanh %12 : vector<3x128xf32>
    %c0_6 = arith.constant 0 : index
    %c0_7 = arith.constant 0 : index
    %14 = vector.load %arg4[%c0_6, %c0_7] : memref<9x3xf32, #tpu.memory_space<vmem>>, vector<9x3xf32>
    %c0_8 = arith.constant 0 : index
    %c0_9 = arith.constant 0 : index
    %15 = vector.load %arg5[%c0_8, %c0_9] : memref<9x1xf32, #tpu.memory_space<vmem>>, vector<9x1xf32>
    %16 = vector.extract_strided_slice %14 {offsets = [0, 0], sizes = [9, 1], strides = [1, 1]} : vector<9x3xf32> to vector<9x1xf32>
    %17 = vector.extract_strided_slice %13 {offsets = [0, 0], sizes = [1, 128], strides = [1, 1]} : vector<3x128xf32> to vector<1x128xf32>
    %18 = vector.broadcast %16 : vector<9x1xf32> to vector<9x128xf32>
    %19 = vector.broadcast %17 : vector<1x128xf32> to vector<9x128xf32>
    %20 = arith.mulf %18, %19 : vector<9x128xf32>
    %21 = vector.extract_strided_slice %14 {offsets = [0, 1], sizes = [9, 1], strides = [1, 1]} : vector<9x3xf32> to vector<9x1xf32>
    %22 = vector.extract_strided_slice %13 {offsets = [1, 0], sizes = [1, 128], strides = [1, 1]} : vector<3x128xf32> to vector<1x128xf32>
    %23 = vector.broadcast %21 : vector<9x1xf32> to vector<9x128xf32>
    %24 = vector.broadcast %22 : vector<1x128xf32> to vector<9x128xf32>
    %25 = arith.mulf %23, %24 : vector<9x128xf32>
    %26 = arith.addf %20, %25 : vector<9x128xf32>
    %27 = vector.extract_strided_slice %14 {offsets = [0, 2], sizes = [9, 1], strides = [1, 1]} : vector<9x3xf32> to vector<9x1xf32>
    %28 = vector.extract_strided_slice %13 {offsets = [2, 0], sizes = [1, 128], strides = [1, 1]} : vector<3x128xf32> to vector<1x128xf32>
    %29 = vector.broadcast %27 : vector<9x1xf32> to vector<9x128xf32>
    %30 = vector.broadcast %28 : vector<1x128xf32> to vector<9x128xf32>
    %31 = arith.mulf %29, %30 : vector<9x128xf32>
    %32 = arith.addf %26, %31 : vector<9x128xf32>
    %33 = vector.broadcast %15 : vector<9x1xf32> to vector<9x128xf32>
    %34 = arith.addf %32, %33 : vector<9x128xf32>
    %35 = math.tanh %34 : vector<9x128xf32>
    %c0_10 = arith.constant 0 : index
    %c0_11 = arith.constant 0 : index
    %36 = vector.load %arg6[%c0_10, %c0_11] : memref<64x9xf32, #tpu.memory_space<vmem>>, vector<64x9xf32>
    %cst_12 = arith.constant dense<0.000000e+00> : vector<64x128xf32>
    %37 = tpu.matmul %36, %35, %cst_12 {dimension_numbers = #tpu.dot_dimension_numbers<[1], [0], [0], [1], [0, 0, 1, 1], [], []>} : vector<64x9xf32>, vector<9x128xf32>, vector<64x128xf32> -> vector<64x128xf32>
    %c0_13 = arith.constant 0 : index
    %c0_14 = arith.constant 0 : index
    %38 = vector.load %arg7[%c0_13, %c0_14] : memref<64x1xf32, #tpu.memory_space<vmem>>, vector<64x1xf32>
    %39 = vector.broadcast %38 : vector<64x1xf32> to vector<64x128xf32>
    %40 = arith.addf %37, %39 : vector<64x128xf32>
    %41 = math.tanh %40 : vector<64x128xf32>
    %c0_15 = arith.constant 0 : index
    %c0_16 = arith.constant 0 : index
    %42 = vector.load %arg8[%c0_15, %c0_16] : memref<256x64xf32, #tpu.memory_space<vmem>>, vector<256x64xf32>
    %cst_17 = arith.constant dense<0.000000e+00> : vector<256x128xf32>
    %43 = tpu.matmul %42, %41, %cst_17 {dimension_numbers = #tpu.dot_dimension_numbers<[1], [0], [0], [1], [0, 0, 1, 1], [], []>} : vector<256x64xf32>, vector<64x128xf32>, vector<256x128xf32> -> vector<256x128xf32>
    %c0_18 = arith.constant 0 : index
    %c0_19 = arith.constant 0 : index
    %44 = vector.load %arg9[%c0_18, %c0_19] : memref<256x1xf32, #tpu.memory_space<vmem>>, vector<256x1xf32>
    %45 = vector.broadcast %44 : vector<256x1xf32> to vector<256x128xf32>
    %46 = arith.addf %43, %45 : vector<256x128xf32>
    %47 = math.tanh %46 : vector<256x128xf32>
    %c0_20 = arith.constant 0 : index
    %c0_21 = arith.constant 0 : index
    %48 = vector.load %arg10[%c0_20, %c0_21] : memref<64x256xf32, #tpu.memory_space<vmem>>, vector<64x256xf32>
    %cst_22 = arith.constant dense<0.000000e+00> : vector<64x128xf32>
    %49 = tpu.matmul %48, %47, %cst_22 {dimension_numbers = #tpu.dot_dimension_numbers<[1], [0], [0], [1], [0, 0, 1, 1], [], []>} : vector<64x256xf32>, vector<256x128xf32>, vector<64x128xf32> -> vector<64x128xf32>
    %c0_23 = arith.constant 0 : index
    %c0_24 = arith.constant 0 : index
    %50 = vector.load %arg11[%c0_23, %c0_24] : memref<64x1xf32, #tpu.memory_space<vmem>>, vector<64x1xf32>
    %51 = vector.broadcast %50 : vector<64x1xf32> to vector<64x128xf32>
    %52 = arith.addf %49, %51 : vector<64x128xf32>
    %53 = math.tanh %52 : vector<64x128xf32>
    %c0_25 = arith.constant 0 : index
    %c0_26 = arith.constant 0 : index
    %54 = vector.load %arg12[%c0_25, %c0_26] : memref<9x64xf32, #tpu.memory_space<vmem>>, vector<9x64xf32>
    %cst_27 = arith.constant dense<0.000000e+00> : vector<9x128xf32>
    %55 = tpu.matmul %54, %53, %cst_27 {dimension_numbers = #tpu.dot_dimension_numbers<[1], [0], [0], [1], [0, 0, 1, 1], [], []>} : vector<9x64xf32>, vector<64x128xf32>, vector<9x128xf32> -> vector<9x128xf32>
    %c0_28 = arith.constant 0 : index
    %c0_29 = arith.constant 0 : index
    %56 = vector.load %arg13[%c0_28, %c0_29] : memref<9x1xf32, #tpu.memory_space<vmem>>, vector<9x1xf32>
    %57 = vector.broadcast %56 : vector<9x1xf32> to vector<9x128xf32>
    %58 = arith.addf %55, %57 : vector<9x128xf32>
    %59 = math.tanh %58 : vector<9x128xf32>
    %c0_30 = arith.constant 0 : index
    %c0_31 = arith.constant 0 : index
    %60 = vector.load %arg14[%c0_30, %c0_31] : memref<1x9xf32, #tpu.memory_space<vmem>>, vector<1x9xf32>
    %c0_32 = arith.constant 0 : index
    %c0_33 = arith.constant 0 : index
    %61 = vector.load %arg15[%c0_32, %c0_33] : memref<1x1xf32, #tpu.memory_space<vmem>>, vector<1x1xf32>
    %62 = vector.extract_strided_slice %60 {offsets = [0, 0], sizes = [1, 1], strides = [1, 1]} : vector<1x9xf32> to vector<1x1xf32>
    %63 = vector.extract_strided_slice %59 {offsets = [0, 0], sizes = [1, 128], strides = [1, 1]} : vector<9x128xf32> to vector<1x128xf32>
    %64 = vector.broadcast %62 : vector<1x1xf32> to vector<1x128xf32>
    %65 = arith.mulf %64, %63 : vector<1x128xf32>
    %66 = vector.extract_strided_slice %60 {offsets = [0, 1], sizes = [1, 1], strides = [1, 1]} : vector<1x9xf32> to vector<1x1xf32>
    %67 = vector.extract_strided_slice %59 {offsets = [1, 0], sizes = [1, 128], strides = [1, 1]} : vector<9x128xf32> to vector<1x128xf32>
    %68 = vector.broadcast %66 : vector<1x1xf32> to vector<1x128xf32>
    %69 = arith.mulf %68, %67 : vector<1x128xf32>
    %70 = arith.addf %65, %69 : vector<1x128xf32>
    %71 = vector.extract_strided_slice %60 {offsets = [0, 2], sizes = [1, 1], strides = [1, 1]} : vector<1x9xf32> to vector<1x1xf32>
    %72 = vector.extract_strided_slice %59 {offsets = [2, 0], sizes = [1, 128], strides = [1, 1]} : vector<9x128xf32> to vector<1x128xf32>
    %73 = vector.broadcast %71 : vector<1x1xf32> to vector<1x128xf32>
    %74 = arith.mulf %73, %72 : vector<1x128xf32>
    %75 = arith.addf %70, %74 : vector<1x128xf32>
    %76 = vector.extract_strided_slice %60 {offsets = [0, 3], sizes = [1, 1], strides = [1, 1]} : vector<1x9xf32> to vector<1x1xf32>
    %77 = vector.extract_strided_slice %59 {offsets = [3, 0], sizes = [1, 128], strides = [1, 1]} : vector<9x128xf32> to vector<1x128xf32>
    %78 = vector.broadcast %76 : vector<1x1xf32> to vector<1x128xf32>
    %79 = arith.mulf %78, %77 : vector<1x128xf32>
    %80 = arith.addf %75, %79 : vector<1x128xf32>
    %81 = vector.extract_strided_slice %60 {offsets = [0, 4], sizes = [1, 1], strides = [1, 1]} : vector<1x9xf32> to vector<1x1xf32>
    %82 = vector.extract_strided_slice %59 {offsets = [4, 0], sizes = [1, 128], strides = [1, 1]} : vector<9x128xf32> to vector<1x128xf32>
    %83 = vector.broadcast %81 : vector<1x1xf32> to vector<1x128xf32>
    %84 = arith.mulf %83, %82 : vector<1x128xf32>
    %85 = arith.addf %80, %84 : vector<1x128xf32>
    %86 = vector.extract_strided_slice %60 {offsets = [0, 5], sizes = [1, 1], strides = [1, 1]} : vector<1x9xf32> to vector<1x1xf32>
    %87 = vector.extract_strided_slice %59 {offsets = [5, 0], sizes = [1, 128], strides = [1, 1]} : vector<9x128xf32> to vector<1x128xf32>
    %88 = vector.broadcast %86 : vector<1x1xf32> to vector<1x128xf32>
    %89 = arith.mulf %88, %87 : vector<1x128xf32>
    %90 = arith.addf %85, %89 : vector<1x128xf32>
    %91 = vector.extract_strided_slice %60 {offsets = [0, 6], sizes = [1, 1], strides = [1, 1]} : vector<1x9xf32> to vector<1x1xf32>
    %92 = vector.extract_strided_slice %59 {offsets = [6, 0], sizes = [1, 128], strides = [1, 1]} : vector<9x128xf32> to vector<1x128xf32>
    %93 = vector.broadcast %91 : vector<1x1xf32> to vector<1x128xf32>
    %94 = arith.mulf %93, %92 : vector<1x128xf32>
    %95 = arith.addf %90, %94 : vector<1x128xf32>
    %96 = vector.extract_strided_slice %60 {offsets = [0, 7], sizes = [1, 1], strides = [1, 1]} : vector<1x9xf32> to vector<1x1xf32>
    %97 = vector.extract_strided_slice %59 {offsets = [7, 0], sizes = [1, 128], strides = [1, 1]} : vector<9x128xf32> to vector<1x128xf32>
    %98 = vector.broadcast %96 : vector<1x1xf32> to vector<1x128xf32>
    %99 = arith.mulf %98, %97 : vector<1x128xf32>
    %100 = arith.addf %95, %99 : vector<1x128xf32>
    %101 = vector.extract_strided_slice %60 {offsets = [0, 8], sizes = [1, 1], strides = [1, 1]} : vector<1x9xf32> to vector<1x1xf32>
    %102 = vector.extract_strided_slice %59 {offsets = [8, 0], sizes = [1, 128], strides = [1, 1]} : vector<9x128xf32> to vector<1x128xf32>
    %103 = vector.broadcast %101 : vector<1x1xf32> to vector<1x128xf32>
    %104 = arith.mulf %103, %102 : vector<1x128xf32>
    %105 = arith.addf %100, %104 : vector<1x128xf32>
    %106 = vector.broadcast %61 : vector<1x1xf32> to vector<1x128xf32>
    %107 = arith.addf %105, %106 : vector<1x128xf32>
    %c0_34 = arith.constant 0 : index
    %c0_35 = arith.constant 0 : index
    %108 = vector.load %arg16[%c0_34, %c0_35] : memref<1x128xf32, #tpu.memory_space<vmem>>, vector<1x128xf32>
    tpu.vector_store %arg16[%c0_34, %c0_35], %107 {strides = array<i32>} : memref<1x128xf32, #tpu.memory_space<vmem>>, vector<1x128xf32>,
    return
  }
  func.func @transform_0(%arg0: i32) -> (i32, i32) {
    %c0_i32 = arith.constant 0 : i32
    %c0_i32_0 = arith.constant 0 : i32
    return %arg0, %c0_i32 : i32, i32
  }
  func.func @transform_1(%arg0: i32) -> (i32, i32) {
    %c0_i32 = arith.constant 0 : i32
    %c0_i32_0 = arith.constant 0 : i32
    %c0_i32_1 = arith.constant 0 : i32
    return %c0_i32, %c0_i32_0 : i32, i32
  }
  func.func @transform_2(%arg0: i32) -> (i32, i32) {
    %c0_i32 = arith.constant 0 : i32
    %c0_i32_0 = arith.constant 0 : i32
    %c0_i32_1 = arith.constant 0 : i32
    return %c0_i32, %c0_i32_0 : i32, i32
  }
  func.func @transform_3(%arg0: i32) -> (i32, i32) {
    %c0_i32 = arith.constant 0 : i32
    %c0_i32_0 = arith.constant 0 : i32
    %c0_i32_1 = arith.constant 0 : i32
    return %c0_i32, %c0_i32_0 : i32, i32
  }
  func.func @transform_4(%arg0: i32) -> (i32, i32) {
    %c0_i32 = arith.constant 0 : i32
    %c0_i32_0 = arith.constant 0 : i32
    %c0_i32_1 = arith.constant 0 : i32
    return %c0_i32, %c0_i32_0 : i32, i32
  }
  func.func @transform_5(%arg0: i32) -> (i32, i32) {
    %c0_i32 = arith.constant 0 : i32
    %c0_i32_0 = arith.constant 0 : i32
    %c0_i32_1 = arith.constant 0 : i32
    return %c0_i32, %c0_i32_0 : i32, i32
  }
  func.func @transform_6(%arg0: i32) -> (i32, i32) {
    %c0_i32 = arith.constant 0 : i32
    %c0_i32_0 = arith.constant 0 : i32
    %c0_i32_1 = arith.constant 0 : i32
    return %c0_i32, %c0_i32_0 : i32, i32
  }
  func.func @transform_7(%arg0: i32) -> (i32, i32) {
    %c0_i32 = arith.constant 0 : i32
    %c0_i32_0 = arith.constant 0 : i32
    %c0_i32_1 = arith.constant 0 : i32
    return %c0_i32, %c0_i32_0 : i32, i32
  }
  func.func @transform_8(%arg0: i32) -> (i32, i32) {
    %c0_i32 = arith.constant 0 : i32
    %c0_i32_0 = arith.constant 0 : i32
    %c0_i32_1 = arith.constant 0 : i32
    return %c0_i32, %c0_i32_0 : i32, i32
  }
  func.func @transform_9(%arg0: i32) -> (i32, i32) {
    %c0_i32 = arith.constant 0 : i32
    %c0_i32_0 = arith.constant 0 : i32
    %c0_i32_1 = arith.constant 0 : i32
    return %c0_i32, %c0_i32_0 : i32, i32
  }
  func.func @transform_10(%arg0: i32) -> (i32, i32) {
    %c0_i32 = arith.constant 0 : i32
    %c0_i32_0 = arith.constant 0 : i32
    %c0_i32_1 = arith.constant 0 : i32
    return %c0_i32, %c0_i32_0 : i32, i32
  }
  func.func @transform_11(%arg0: i32) -> (i32, i32) {
    %c0_i32 = arith.constant 0 : i32
    %c0_i32_0 = arith.constant 0 : i32
    %c0_i32_1 = arith.constant 0 : i32
    return %c0_i32, %c0_i32_0 : i32, i32
  }
  func.func @transform_12(%arg0: i32) -> (i32, i32) {
    %c0_i32 = arith.constant 0 : i32
    %c0_i32_0 = arith.constant 0 : i32
    %c0_i32_1 = arith.constant 0 : i32
    return %c0_i32, %c0_i32_0 : i32, i32
  }
  func.func @transform_13(%arg0: i32) -> (i32, i32) {
    %c0_i32 = arith.constant 0 : i32
    %c0_i32_0 = arith.constant 0 : i32
    %c0_i32_1 = arith.constant 0 : i32
    return %c0_i32, %c0_i32_0 : i32, i32
  }
  func.func @transform_14(%arg0: i32) -> (i32, i32) {
    %c0_i32 = arith.constant 0 : i32
    %c0_i32_0 = arith.constant 0 : i32
    %c0_i32_1 = arith.constant 0 : i32
    return %c0_i32, %c0_i32_0 : i32, i32
  }
  func.func @transform_15(%arg0: i32) -> (i32, i32) {
    %c0_i32 = arith.constant 0 : i32
    %c0_i32_0 = arith.constant 0 : i32
    return %c0_i32, %arg0 : i32, i32
  }
}

</mosaic_0001>

<llo_original>
// kernel: tpu_custom_call.1
$region0: #{tpu_custom_call.1}
  #allocation0 [shape = 'u32[]', space=smem, size = 0x4, offset = 0x4, fixed_abs, tag = 'smem constant byte address 0x4 - core index']
  #allocation1 [shape = 'u32[144,128]{1,0:T(1,128)}', space=vmem, size = 0x12000, scoped, tag = 'internal scratch']
  #allocation2 [shape = 'f32[1,1]{1,0:T(1,128)S(1)}', space=vmem, size = 0x200, scoped, tag = 'scoped memory for tpu_custom_call.1']
  %s0 = inlined_call_operand.vmem [shape: f32[300,8], index: 0, kind: input, shape index: {}]
  %s1 = inlined_call_operand.vmem [shape: f32[3,8], index: 1, kind: input, shape index: {}]
  %s2 = inlined_call_operand.vmem [shape: f32[3,1], index: 2, kind: input, shape index: {}]
  %s3 = inlined_call_operand.vmem [shape: f32[9,3], index: 3, kind: input, shape index: {}]
  %s4 = inlined_call_operand.vmem [shape: f32[9,1], index: 4, kind: input, shape index: {}]
  %s5 = inlined_call_operand.vmem [shape: f32[64,9], index: 5, kind: input, shape index: {}]
  %s6 = inlined_call_operand.vmem [shape: f32[64,1], index: 6, kind: input, shape index: {}]
  %s7 = inlined_call_operand.vmem [shape: f32[256,64], index: 7, kind: input, shape index: {}]
  %s8 = inlined_call_operand.vmem [shape: f32[256,1], index: 8, kind: input, shape index: {}]
  %s9 = inlined_call_operand.vmem [shape: f32[64,256], index: 9, kind: input, shape index: {}]
  %s10 = inlined_call_operand.vmem [shape: f32[64,1], index: 10, kind: input, shape index: {}]
  %s11 = inlined_call_operand.vmem [shape: f32[9,64], index: 11, kind: input, shape index: {}]
  %s12 = inlined_call_operand.vmem [shape: f32[9,1], index: 12, kind: input, shape index: {}]
  %s13 = inlined_call_operand.vmem [shape: f32[1,9], index: 13, kind: input, shape index: {}]
  %s14 = inlined_call_operand.<no memory space> [shape: f32[1,1], index: 14, kind: input, shape index: {}]
  %s15 = inlined_call_operand.hbm [shape: f32[1,300], index: 15, kind: output, shape index: {}]
  %s16 = sld [smem:[#allocation0]]
  $region93: #{tpu_custom_call.1} parent=0
    _
  %s18 = ssub.s32 1, %s16
  %s19 = scalar_select 0, %s18, %s16
  %v20 = vstv %s14
  %21 = vst [vmem:[#allocation2] sm:$0x1] %v20
  $region1: #{tpu_custom_call.1} parent=0
    #allocation3 [shape = 'u8[1024]{0}', space=vmem, size = 0x400, scoped, tag = 'output window, operand 0']
    #allocation4 [shape = 's32[2]{0}', space=sflag, size = 0x8, scoped, tag = 'scoped memory for tpu_custom_call.1']
    %22 = vsyncpa [#allocation4], 0
    %s23 = scalar_lea.sflag [#allocation4], 1
    %24 = vsyncpa %s23, 0
    loop: start=0, step=1, limit=5
    $region2: #{tpu_custom_call.1} parent=1 // loop_pre_header
      _
    $region3: #{tpu_custom_call.1} parent=1 // loop_header
      %s26 = sphi 0, %s30
      %p27 = scmp.ge.s32.totalorder %s26, 5
      %s36 = sphi 0, %s38
      %s39 = sphi 0, %s36
      %s40 = sphi 0, %s39
      %s56 = sphi 0, %s40
      %s60 = sphi 0, %s60
      %s62 = sphi 0, %s60
      %s63 = sphi 0, %s62
      %s77 = sphi 0, %s63
      %s81 = sphi 0, %s81
      %s83 = sphi 0, %s81
      %s84 = sphi 0, %s83
      %s98 = sphi 0, %s84
      %s102 = sphi 0, %s102
      %s104 = sphi 0, %s102
      %s105 = sphi 0, %s104
      %s119 = sphi 0, %s105
      %s123 = sphi 0, %s123
      %s125 = sphi 0, %s123
      %s126 = sphi 0, %s125
      %s140 = sphi 0, %s126
      %s144 = sphi 0, %s144
      %s146 = sphi 0, %s144
      %s147 = sphi 0, %s146
      %s161 = sphi 0, %s147
      %s165 = sphi 0, %s165
      %s167 = sphi 0, %s165
      %s168 = sphi 0, %s167
      %s182 = sphi 0, %s168
      %s186 = sphi 0, %s186
      %s188 = sphi 0, %s186
      %s189 = sphi 0, %s188
      %s203 = sphi 0, %s189
      %s207 = sphi 0, %s207
      %s209 = sphi 0, %s207
      %s210 = sphi 0, %s209
      %s224 = sphi 0, %s210
      %s228 = sphi 0, %s228
      %s230 = sphi 0, %s228
      %s231 = sphi 0, %s230
      %s245 = sphi 0, %s231
      %s249 = sphi 0, %s249
      %s251 = sphi 0, %s249
      %s252 = sphi 0, %s251
      %s266 = sphi 0, %s252
      %s270 = sphi 0, %s270
      %s272 = sphi 0, %s270
      %s273 = sphi 0, %s272
      %s287 = sphi 0, %s273
      %s291 = sphi 0, %s291
      %s293 = sphi 0, %s291
      %s294 = sphi 0, %s293
      %s308 = sphi 0, %s294
      %s312 = sphi 0, %s312
      %s314 = sphi 0, %s312
      %s315 = sphi 0, %s314
      %s329 = sphi 0, %s315
      %s333 = sphi 0, %s333
      %s335 = sphi 0, %s333
      %s336 = sphi 0, %s335
      %s350 = sphi 0, %s336
      %s356 = sphi 0, %s358
      %s359 = sphi 0, %s356
      %s360 = sphi 0, %s359
      %s376 = sphi 0, %s360
    $region4: #{tpu_custom_call.1} parent=1 // loop_header_branch
      %29 = sbr.rel (%p27) target = $region8
    $region5: #{tpu_custom_call.1} parent=1 // loop_body
      %s31 = ssub.s32 %s26, 1
      %s32 = ssub.s32 %s26, 2
      %s33 = sadd.s32 %s26, 1
      %s34 = ssub.s32 %s26, %s33
      %p35 = scmp.eq.s32.totalorder %s34, 0
      %s37 = sadd.s32 %s36, 1
      %s38 = scalar_select %p35, %s36, %s37
      %p41 = pneg %p35
      %p42 = scmp.eq.s32.totalorder %s26, 2
      %p43 = por %p41, %p42
      %p44 = scmp.ne.s32.totalorder %s36, %s39
      %p45 = scmp.eq.s32.totalorder %s26, 0
      %p46 = por %p44, %p45
      %p47 = scmp.ne.s32.totalorder %s36, %s39
      %p48 = scmp.eq.s32.totalorder %s31, 2
      %p49 = por %p47, %p48
      %p50 = scmp.ne.s32.totalorder %s39, %s40
      %p51 = scmp.eq.s32.totalorder %s31, 0
      %p52 = por %p50, %p51
      %p53 = scmp.ne.s32.totalorder %s39, %s40
      %p54 = scmp.eq.s32.totalorder %s32, 2
      %p55 = por %p53, %p54
      %p57 = scmp.ne.s32.totalorder %s40, %s56
      %p58 = scmp.eq.s32.totalorder %s32, 0
      %p59 = por %p57, %p58
      %s61 = sadd.s32 %s60, 1
      %p64 = scmp.eq.s32.totalorder %s26, 2
      %p65 = scmp.ne.s32.totalorder %s60, %s62
      %p66 = scmp.eq.s32.totalorder %s26, 0
      %p67 = por %p65, %p66
      %p68 = scmp.ne.s32.totalorder %s60, %s62
      %p69 = scmp.eq.s32.totalorder %s31, 2
      %p70 = por %p68, %p69
      %p71 = scmp.ne.s32.totalorder %s62, %s63
      %p72 = scmp.eq.s32.totalorder %s31, 0
      %p73 = por %p71, %p72
      %p74 = scmp.ne.s32.totalorder %s62, %s63
      %p75 = scmp.eq.s32.totalorder %s32, 2
      %p76 = por %p74, %p75
      %p78 = scmp.ne.s32.totalorder %s63, %s77
      %p79 = scmp.eq.s32.totalorder %s32, 0
      %p80 = por %p78, %p79
      %s82 = sadd.s32 %s81, 1
      %p85 = scmp.eq.s32.totalorder %s26, 2
      %p86 = scmp.ne.s32.totalorder %s81, %s83
      %p87 = scmp.eq.s32.totalorder %s26, 0
      %p88 = por %p86, %p87
      %p89 = scmp.ne.s32.totalorder %s81, %s83
      %p90 = scmp.eq.s32.totalorder %s31, 2
      %p91 = por %p89, %p90
      %p92 = scmp.ne.s32.totalorder %s83, %s84
      %p93 = scmp.eq.s32.totalorder %s31, 0
      %p94 = por %p92, %p93
      %p95 = scmp.ne.s32.totalorder %s83, %s84
      %p96 = scmp.eq.s32.totalorder %s32, 2
      %p97 = por %p95, %p96
      %p99 = scmp.ne.s32.totalorder %s84, %s98
      %p100 = scmp.eq.s32.totalorder %s32, 0
      %p101 = por %p99, %p100
      %s103 = sadd.s32 %s102, 1
      %p106 = scmp.eq.s32.totalorder %s26, 2
      %p107 = scmp.ne.s32.totalorder %s102, %s104
      %p108 = scmp.eq.s32.totalorder %s26, 0
      %p109 = por %p107, %p108
      %p110 = scmp.ne.s32.totalorder %s102, %s104
      %p111 = scmp.eq.s32.totalorder %s31, 2
      %p112 = por %p110, %p111
      %p113 = scmp.ne.s32.totalorder %s104, %s105
      %p114 = scmp.eq.s32.totalorder %s31, 0
      %p115 = por %p113, %p114
      %p116 = scmp.ne.s32.totalorder %s104, %s105
      %p117 = scmp.eq.s32.totalorder %s32, 2
      %p118 = por %p116, %p117
      %p120 = scmp.ne.s32.totalorder %s105, %s119
      %p121 = scmp.eq.s32.totalorder %s32, 0
      %p122 = por %p120, %p121
      %s124 = sadd.s32 %s123, 1
      %p127 = scmp.eq.s32.totalorder %s26, 2
      %p128 = scmp.ne.s32.totalorder %s123, %s125
      %p129 = scmp.eq.s32.totalorder %s26, 0
      %p130 = por %p128, %p129
      %p131 = scmp.ne.s32.totalorder %s123, %s125
      %p132 = scmp.eq.s32.totalorder %s31, 2
      %p133 = por %p131, %p132
      %p134 = scmp.ne.s32.totalorder %s125, %s126
      %p135 = scmp.eq.s32.totalorder %s31, 0
      %p136 = por %p134, %p135
      %p137 = scmp.ne.s32.totalorder %s125, %s126
      %p138 = scmp.eq.s32.totalorder %s32, 2
      %p139 = por %p137, %p138
      %p141 = scmp.ne.s32.totalorder %s126, %s140
      %p142 = scmp.eq.s32.totalorder %s32, 0
      %p143 = por %p141, %p142
      %s145 = sadd.s32 %s144, 1
      %p148 = scmp.eq.s32.totalorder %s26, 2
      %p149 = scmp.ne.s32.totalorder %s144, %s146
      %p150 = scmp.eq.s32.totalorder %s26, 0
      %p151 = por %p149, %p150
      %p152 = scmp.ne.s32.totalorder %s144, %s146
      %p153 = scmp.eq.s32.totalorder %s31, 2
      %p154 = por %p152, %p153
      %p155 = scmp.ne.s32.totalorder %s146, %s147
      %p156 = scmp.eq.s32.totalorder %s31, 0
      %p157 = por %p155, %p156
      %p158 = scmp.ne.s32.totalorder %s146, %s147
      %p159 = scmp.eq.s32.totalorder %s32, 2
      %p160 = por %p158, %p159
      %p162 = scmp.ne.s32.totalorder %s147, %s161
      %p163 = scmp.eq.s32.totalorder %s32, 0
      %p164 = por %p162, %p163
      %s166 = sadd.s32 %s165, 1
      %p169 = scmp.eq.s32.totalorder %s26, 2
      %p170 = scmp.ne.s32.totalorder %s165, %s167
      %p171 = scmp.eq.s32.totalorder %s26, 0
      %p172 = por %p170, %p171
      %p173 = scmp.ne.s32.totalorder %s165, %s167
      %p174 = scmp.eq.s32.totalorder %s31, 2
      %p175 = por %p173, %p174
      %p176 = scmp.ne.s32.totalorder %s167, %s168
      %p177 = scmp.eq.s32.totalorder %s31, 0
      %p178 = por %p176, %p177
      %p179 = scmp.ne.s32.totalorder %s167, %s168
      %p180 = scmp.eq.s32.totalorder %s32, 2
      %p181 = por %p179, %p180
      %p183 = scmp.ne.s32.totalorder %s168, %s182
      %p184 = scmp.eq.s32.totalorder %s32, 0
      %p185 = por %p183, %p184
      %s187 = sadd.s32 %s186, 1
      %p190 = scmp.eq.s32.totalorder %s26, 2
      %p191 = scmp.ne.s32.totalorder %s186, %s188
      %p192 = scmp.eq.s32.totalorder %s26, 0
      %p193 = por %p191, %p192
      %p194 = scmp.ne.s32.totalorder %s186, %s188
      %p195 = scmp.eq.s32.totalorder %s31, 2
      %p196 = por %p194, %p195
      %p197 = scmp.ne.s32.totalorder %s188, %s189
      %p198 = scmp.eq.s32.totalorder %s31, 0
      %p199 = por %p197, %p198
      %p200 = scmp.ne.s32.totalorder %s188, %s189
      %p201 = scmp.eq.s32.totalorder %s32, 2
      %p202 = por %p200, %p201
      %p204 = scmp.ne.s32.totalorder %s189, %s203
      %p205 = scmp.eq.s32.totalorder %s32, 0
      %p206 = por %p204, %p205
      %s208 = sadd.s32 %s207, 1
      %p211 = scmp.eq.s32.totalorder %s26, 2
      %p212 = scmp.ne.s32.totalorder %s207, %s209
      %p213 = scmp.eq.s32.totalorder %s26, 0
      %p214 = por %p212, %p213
      %p215 = scmp.ne.s32.totalorder %s207, %s209
      %p216 = scmp.eq.s32.totalorder %s31, 2
      %p217 = por %p215, %p216
      %p218 = scmp.ne.s32.totalorder %s209, %s210
      %p219 = scmp.eq.s32.totalorder %s31, 0
      %p220 = por %p218, %p219
      %p221 = scmp.ne.s32.totalorder %s209, %s210
      %p222 = scmp.eq.s32.totalorder %s32, 2
      %p223 = por %p221, %p222
      %p225 = scmp.ne.s32.totalorder %s210, %s224
      %p226 = scmp.eq.s32.totalorder %s32, 0
      %p227 = por %p225, %p226
      %s229 = sadd.s32 %s228, 1
      %p232 = scmp.eq.s32.totalorder %s26, 2
      %p233 = scmp.ne.s32.totalorder %s228, %s230
      %p234 = scmp.eq.s32.totalorder %s26, 0
      %p235 = por %p233, %p234
      %p236 = scmp.ne.s32.totalorder %s228, %s230
      %p237 = scmp.eq.s32.totalorder %s31, 2
      %p238 = por %p236, %p237
      %p239 = scmp.ne.s32.totalorder %s230, %s231
      %p240 = scmp.eq.s32.totalorder %s31, 0
      %p241 = por %p239, %p240
      %p242 = scmp.ne.s32.totalorder %s230, %s231
      %p243 = scmp.eq.s32.totalorder %s32, 2
      %p244 = por %p242, %p243
      %p246 = scmp.ne.s32.totalorder %s231, %s245
      %p247 = scmp.eq.s32.totalorder %s32, 0
      %p248 = por %p246, %p247
      %s250 = sadd.s32 %s249, 1
      %p253 = scmp.eq.s32.totalorder %s26, 2
      %p254 = scmp.ne.s32.totalorder %s249, %s251
      %p255 = scmp.eq.s32.totalorder %s26, 0
      %p256 = por %p254, %p255
      %p257 = scmp.ne.s32.totalorder %s249, %s251
      %p258 = scmp.eq.s32.totalorder %s31, 2
      %p259 = por %p257, %p258
      %p260 = scmp.ne.s32.totalorder %s251, %s252
      %p261 = scmp.eq.s32.totalorder %s31, 0
      %p262 = por %p260, %p261
      %p263 = scmp.ne.s32.totalorder %s251, %s252
      %p264 = scmp.eq.s32.totalorder %s32, 2
      %p265 = por %p263, %p264
      %p267 = scmp.ne.s32.totalorder %s252, %s266
      %p268 = scmp.eq.s32.totalorder %s32, 0
      %p269 = por %p267, %p268
      %s271 = sadd.s32 %s270, 1
      %p274 = scmp.eq.s32.totalorder %s26, 2
      %p275 = scmp.ne.s32.totalorder %s270, %s272
      %p276 = scmp.eq.s32.totalorder %s26, 0
      %p277 = por %p275, %p276
      %p278 = scmp.ne.s32.totalorder %s270, %s272
      %p279 = scmp.eq.s32.totalorder %s31, 2
      %p280 = por %p278, %p279
      %p281 = scmp.ne.s32.totalorder %s272, %s273
      %p282 = scmp.eq.s32.totalorder %s31, 0
      %p283 = por %p281, %p282
      %p284 = scmp.ne.s32.totalorder %s272, %s273
      %p285 = scmp.eq.s32.totalorder %s32, 2
      %p286 = por %p284, %p285
      %p288 = scmp.ne.s32.totalorder %s273, %s287
      %p289 = scmp.eq.s32.totalorder %s32, 0
      %p290 = por %p288, %p289
      %s292 = sadd.s32 %s291, 1
      %p295 = scmp.eq.s32.totalorder %s26, 2
      %p296 = scmp.ne.s32.totalorder %s291, %s293
      %p297 = scmp.eq.s32.totalorder %s26, 0
      %p298 = por %p296, %p297
      %p299 = scmp.ne.s32.totalorder %s291, %s293
      %p300 = scmp.eq.s32.totalorder %s31, 2
      %p301 = por %p299, %p300
      %p302 = scmp.ne.s32.totalorder %s293, %s294
      %p303 = scmp.eq.s32.totalorder %s31, 0
      %p304 = por %p302, %p303
      %p305 = scmp.ne.s32.totalorder %s293, %s294
      %p306 = scmp.eq.s32.totalorder %s32, 2
      %p307 = por %p305, %p306
      %p309 = scmp.ne.s32.totalorder %s294, %s308
      %p310 = scmp.eq.s32.totalorder %s32, 0
      %p311 = por %p309, %p310
      %s313 = sadd.s32 %s312, 1
      %p316 = scmp.eq.s32.totalorder %s26, 2
      %p317 = scmp.ne.s32.totalorder %s312, %s314
      %p318 = scmp.eq.s32.totalorder %s26, 0
      %p319 = por %p317, %p318
      %p320 = scmp.ne.s32.totalorder %s312, %s314
      %p321 = scmp.eq.s32.totalorder %s31, 2
      %p322 = por %p320, %p321
      %p323 = scmp.ne.s32.totalorder %s314, %s315
      %p324 = scmp.eq.s32.totalorder %s31, 0
      %p325 = por %p323, %p324
      %p326 = scmp.ne.s32.totalorder %s314, %s315
      %p327 = scmp.eq.s32.totalorder %s32, 2
      %p328 = por %p326, %p327
      %p330 = scmp.ne.s32.totalorder %s315, %s329
      %p331 = scmp.eq.s32.totalorder %s32, 0
      %p332 = por %p330, %p331
      %s334 = sadd.s32 %s333, 1
      %p337 = scmp.eq.s32.totalorder %s26, 2
      %p338 = scmp.ne.s32.totalorder %s333, %s335
      %p339 = scmp.eq.s32.totalorder %s26, 0
      %p340 = por %p338, %p339
      %p341 = scmp.ne.s32.totalorder %s333, %s335
      %p342 = scmp.eq.s32.totalorder %s31, 2
      %p343 = por %p341, %p342
      %p344 = scmp.ne.s32.totalorder %s335, %s336
      %p345 = scmp.eq.s32.totalorder %s31, 0
      %p346 = por %p344, %p345
      %p347 = scmp.ne.s32.totalorder %s335, %s336
      %p348 = scmp.eq.s32.totalorder %s32, 2
      %p349 = por %p347, %p348
      %p351 = scmp.ne.s32.totalorder %s336, %s350
      %p352 = scmp.eq.s32.totalorder %s32, 0
      %p353 = por %p351, %p352
      %s354 = ssub.s32 %s26, %s33
      %p355 = scmp.eq.s32.totalorder %s354, 0
      %s357 = sadd.s32 %s356, 1
      %s358 = scalar_select %p355, %s356, %s357
      %p361 = pneg %p355
      %p362 = scmp.eq.s32.totalorder %s26, 2
      %p363 = por %p361, %p362
      %p364 = scmp.ne.s32.totalorder %s356, %s359
      %p365 = scmp.eq.s32.totalorder %s26, 0
      %p366 = por %p364, %p365
      %p367 = scmp.ne.s32.totalorder %s356, %s359
      %p368 = scmp.eq.s32.totalorder %s31, 2
      %p369 = por %p367, %p368
      %p370 = scmp.ne.s32.totalorder %s359, %s360
      %p371 = scmp.eq.s32.totalorder %s31, 0
      %p372 = por %p370, %p371
      %p373 = scmp.ne.s32.totalorder %s359, %s360
      %p374 = scmp.eq.s32.totalorder %s32, 2
      %p375 = por %p373, %p374
      %p377 = scmp.ne.s32.totalorder %s360, %s376
      %p378 = scmp.eq.s32.totalorder %s32, 0
      %p379 = por %p377, %p378
      %p380 = scmp.le.s32.totalorder 1, %s26
      %p381 = scmp.lt.s32.totalorder %s26, 4
      %p382 = pnand %p380, %p381
      %p383 = pneg %p382
      // Predicated region
      $region9: #{tpu_custom_call.1} parent=5 // pred_check
        _
      $region10: #{tpu_custom_call.1} parent=5 // pred_check_branch
        %385 = sbr.rel (%p382) target = $region12
      $region11: #{tpu_custom_call.1} parent=5 // pred_region
        %s386 = ssub.s32 %s26, 1
        // Predicated region
        $region13: #{tpu_custom_call.1} parent=11 // pred_check
          %p387 = pneg %p73
        $region14: #{tpu_custom_call.1} parent=11 // pred_check_branch
          %389 = sbr.rel (%p387) target = $region16
        $region15: #{tpu_custom_call.1} parent=11 // pred_region
          _
        $region16: #{tpu_custom_call.1} parent=11 // pred_fallthru
          _
        // Predicated region
        $region17: #{tpu_custom_call.1} parent=11 // pred_check
          %p390 = pneg %p94
        $region18: #{tpu_custom_call.1} parent=11 // pred_check_branch
          %392 = sbr.rel (%p390) target = $region20
        $region19: #{tpu_custom_call.1} parent=11 // pred_region
          _
        $region20: #{tpu_custom_call.1} parent=11 // pred_fallthru
          _
        // Predicated region
        $region21: #{tpu_custom_call.1} parent=11 // pred_check
          %p393 = pneg %p115
        $region22: #{tpu_custom_call.1} parent=11 // pred_check_branch
          %395 = sbr.rel (%p393) target = $region24
        $region23: #{tpu_custom_call.1} parent=11 // pred_region
          _
        $region24: #{tpu_custom_call.1} parent=11 // pred_fallthru
          _
        // Predicated region
        $region25: #{tpu_custom_call.1} parent=11 // pred_check
          %p396 = pneg %p136
        $region26: #{tpu_custom_call.1} parent=11 // pred_check_branch
          %398 = sbr.rel (%p396) target = $region28
        $region27: #{tpu_custom_call.1} parent=11 // pred_region
          _
        $region28: #{tpu_custom_call.1} parent=11 // pred_fallthru
          _
        // Predicated region
        $region29: #{tpu_custom_call.1} parent=11 // pred_check
          %p399 = pneg %p157
        $region30: #{tpu_custom_call.1} parent=11 // pred_check_branch
          %401 = sbr.rel (%p399) target = $region32
        $region31: #{tpu_custom_call.1} parent=11 // pred_region
          _
        $region32: #{tpu_custom_call.1} parent=11 // pred_fallthru
          _
        // Predicated region
        $region33: #{tpu_custom_call.1} parent=11 // pred_check
          %p402 = pneg %p178
        $region34: #{tpu_custom_call.1} parent=11 // pred_check_branch
          %404 = sbr.rel (%p402) target = $region36
        $region35: #{tpu_custom_call.1} parent=11 // pred_region
          _
        $region36: #{tpu_custom_call.1} parent=11 // pred_fallthru
          _
        // Predicated region
        $region37: #{tpu_custom_call.1} parent=11 // pred_check
          %p405 = pneg %p199
        $region38: #{tpu_custom_call.1} parent=11 // pred_check_branch
          %407 = sbr.rel (%p405) target = $region40
        $region39: #{tpu_custom_call.1} parent=11 // pred_region
          _
        $region40: #{tpu_custom_call.1} parent=11 // pred_fallthru
          _
        // Predicated region
        $region41: #{tpu_custom_call.1} parent=11 // pred_check
          %p408 = pneg %p220
        $region42: #{tpu_custom_call.1} parent=11 // pred_check_branch
          %410 = sbr.rel (%p408) target = $region44
        $region43: #{tpu_custom_call.1} parent=11 // pred_region
          _
        $region44: #{tpu_custom_call.1} parent=11 // pred_fallthru
          _
        // Predicated region
        $region45: #{tpu_custom_call.1} parent=11 // pred_check
          %p411 = pneg %p241
        $region46: #{tpu_custom_call.1} parent=11 // pred_check_branch
          %413 = sbr.rel (%p411) target = $region48
        $region47: #{tpu_custom_call.1} parent=11 // pred_region
          _
        $region48: #{tpu_custom_call.1} parent=11 // pred_fallthru
          _
        // Predicated region
        $region49: #{tpu_custom_call.1} parent=11 // pred_check
          %p414 = pneg %p262
        $region50: #{tpu_custom_call.1} parent=11 // pred_check_branch
          %416 = sbr.rel (%p414) target = $region52
        $region51: #{tpu_custom_call.1} parent=11 // pred_region
          _
        $region52: #{tpu_custom_call.1} parent=11 // pred_fallthru
          _
        // Predicated region
        $region53: #{tpu_custom_call.1} parent=11 // pred_check
          %p417 = pneg %p283
        $region54: #{tpu_custom_call.1} parent=11 // pred_check_branch
          %419 = sbr.rel (%p417) target = $region56
        $region55: #{tpu_custom_call.1} parent=11 // pred_region
          _
        $region56: #{tpu_custom_call.1} parent=11 // pred_fallthru
          _
        // Predicated region
        $region57: #{tpu_custom_call.1} parent=11 // pred_check
          %p420 = pneg %p304
        $region58: #{tpu_custom_call.1} parent=11 // pred_check_branch
          %422 = sbr.rel (%p420) target = $region60
        $region59: #{tpu_custom_call.1} parent=11 // pred_region
          _
        $region60: #{tpu_custom_call.1} parent=11 // pred_fallthru
          _
        // Predicated region
        $region61: #{tpu_custom_call.1} parent=11 // pred_check
          %p423 = pneg %p325
        $region62: #{tpu_custom_call.1} parent=11 // pred_check_branch
          %425 = sbr.rel (%p423) target = $region64
        $region63: #{tpu_custom_call.1} parent=11 // pred_region
          _
        $region64: #{tpu_custom_call.1} parent=11 // pred_fallthru
          _
        // Predicated region
        $region65: #{tpu_custom_call.1} parent=11 // pred_check
          %p426 = pneg %p346
        $region66: #{tpu_custom_call.1} parent=11 // pred_check_branch
          %428 = sbr.rel (%p426) target = $region68
        $region67: #{tpu_custom_call.1} parent=11 // pred_region
          _
        $region68: #{tpu_custom_call.1} parent=11 // pred_fallthru
          _
      $region12: #{tpu_custom_call.1} parent=5 // pred_fallthru
        _
      %p429 = scmp.lt.s32.totalorder %s26, 3
      // Predicated region
      $region69: #{tpu_custom_call.1} parent=5 // pred_check
        %p430 = pneg %p429
      $region70: #{tpu_custom_call.1} parent=5 // pred_check_branch
        %432 = sbr.rel (%p430) target = $region72
      $region71: #{tpu_custom_call.1} parent=5 // pred_region
        // Predicated region
        $region73: #{tpu_custom_call.1} parent=71 // pred_check
          %p433 = pneg %p46
        $region74: #{tpu_custom_call.1} parent=71 // pred_check_branch
          %435 = sbr.rel (%p433) target = $region76
        $region75: #{tpu_custom_call.1} parent=71 // pred_region
          %s436 = smul.u32 16, %s26
          %s437 = ssub.s32 38, %s436
          %p438 = scmp.lt.s32.totalorder %s437, 16
          %s439 = scalar_select %p438, %s437, 16
          %s440 = smul.u32 128, %s439
          %p441 = scmp.lt.s32.totalorder %s436, 37
          %s442 = scalar_select %p441, %s436, 37
          %s443 = smul.addr %s442, 8
          %s444 = scalar_lea.vmem %s0, %s443
          %s445 = smul.u32 16, %s26
          %s446 = ssub.s32 38, %s445
          %p447 = scmp.lt.s32.totalorder %s446, 16
          %s448 = scalar_select %p447, %s446, 16
          %s449 = smul.u32 128, %s448
        $region76: #{tpu_custom_call.1} parent=71 // pred_fallthru
          _
      $region72: #{tpu_custom_call.1} parent=5 // pred_fallthru
        _
      %p450 = scmp.le.s32.totalorder 1, %s26
      %p451 = scmp.lt.s32.totalorder %s26, 4
      %p452 = pnand %p450, %p451
      %p453 = pneg %p452
      // Predicated region
      $region77: #{tpu_custom_call.1} parent=5 // pred_check
        _
      $region78: #{tpu_custom_call.1} parent=5 // pred_check_branch
        %455 = sbr.rel (%p452) target = $region80
      $region79: #{tpu_custom_call.1} parent=5 // pred_region
        %s456 = ssub.s32 %s26, 1
        %s457 = smul.u32 16, %s31
        %s458 = ssub.s32 38, %s457
        %p459 = scmp.lt.s32.totalorder %s458, 16
        %s460 = scalar_select %p459, %s458, 16
        %s461 = smul.u32 128, %s460
        %p462 = scmp.lt.s32.totalorder %s457, 37
        %s463 = scalar_select %p462, %s457, 37
        %s464 = smul.addr %s463, 8
        %s465 = scalar_lea.vmem %s0, %s464
        %p466 = pneg %p52
        %p467 = pneg %p49
        %p468 = pneg %p73
        %p469 = pneg %p70
        %p470 = pneg %p94
        %p471 = pneg %p91
        %p472 = pneg %p115
        %p473 = pneg %p112
        %p474 = pneg %p136
        %p475 = pneg %p133
        %p476 = pneg %p157
        %p477 = pneg %p154
        %p478 = pneg %p178
        %p479 = pneg %p175
        %p480 = pneg %p199
        %p481 = pneg %p196
        %p482 = pneg %p220
        %p483 = pneg %p217
        %p484 = pneg %p241
        %p485 = pneg %p238
        %p486 = pneg %p262
        %p487 = pneg %p259
        %p488 = pneg %p283
        %p489 = pneg %p280
        %p490 = pneg %p304
        %p491 = pneg %p301
        %p492 = pneg %p325
        %p493 = pneg %p322
        %p494 = pneg %p346
        %p495 = pneg %p343
        %p496 = pneg %p372
        %p497 = pneg %p369
        %s498 = sand.u32 %s359, 1
        %s499 = scalar_lea.sflag [#allocation4], %s498
        %s500 = sand.u32 %s359, 1
        %s501 = scalar_lea.vmem [#allocation3], %s500
        %s502 = smul.u32 16, %s31
        %s503 = ssub.s32 38, %s502
        %p504 = scmp.lt.s32.totalorder %s503, 16
        %s505 = scalar_select %p504, %s503, 16
        %s506 = smul.u32 128, %s505
        %p507 = scmp.lt.s32.totalorder %s502, 37
        %s508 = scalar_select %p507, %s502, 37
        %s509 = smul.addr %s508, 8
        %s510 = scalar_lea.vmem %s0, %s509
        %s511 = smul.u32 16, %s31
        %s512 = ssub.s32 38, %s511
        %p513 = scmp.lt.s32.totalorder %s512, 16
        %s514 = scalar_select %p513, %s512, 16
        %s515 = smul.u32 128, %s514
        %v516 = vld [vmem:[%s510] sm:$0xff]
        %v517 = vld [vmem:[%s510 + $0x8] sm:$0xff]
        %v518 = vld [vmem:[%s510 + $0x10] sm:$0xff]
        %v519 = vld [vmem:[%s510 + $0x18] sm:$0xff]
        %v520 = vld [vmem:[%s510 + $0x20] sm:$0xff]
        %v521 = vld [vmem:[%s510 + $0x28] sm:$0xff]
        %v522 = vld [vmem:[%s510 + $0x30] sm:$0xff]
        %v523 = vld [vmem:[%s510 + $0x38] sm:$0xff]
        %v524 = vld [vmem:[%s510 + $0x40] sm:$0xff]
        %v525 = vld [vmem:[%s510 + $0x48] sm:$0xff]
        %v526 = vld [vmem:[%s510 + $0x50] sm:$0xff]
        %v527 = vld [vmem:[%s510 + $0x58] sm:$0xff]
        %v528 = vld [vmem:[%s510 + $0x60] sm:$0xff]
        %v529 = vld [vmem:[%s510 + $0x68] sm:$0xff]
        %v530 = vld [vmem:[%s510 + $0x70] sm:$0xff]
        %v531 = vld [vmem:[%s510 + $0x78] sm:$0xff]
        %v532 = vlaneseq
        %v533 = vshrl.u32 %v532, 7
        %v534 = vadd.s32 %v533, 8
        %v535 = vadd.s32 %v533, 16
        %v536 = vadd.s32 %v533, 24
        %v537 = vadd.s32 %v533, 32
        %v538 = vadd.s32 %v533, 40
        %v539 = vadd.s32 %v533, 48
        %v540 = vadd.s32 %v533, 56
        %v541 = vadd.s32 %v533, 64
        %v542 = vadd.s32 %v533, 72
        %v543 = vadd.s32 %v533, 80
        %v544 = vadd.s32 %v533, 88
        %v545 = vadd.s32 %v533, 96
        %v546 = vadd.s32 %v533, 104
        %v547 = vadd.s32 %v533, 112
        %v548 = vadd.s32 %v533, 120
        %s549 = smul.u32 %s31, 128
        %s550 = ssub.s32 300, %s549
        %v551 = vstv %s550
        %vm552 = vcmp.lt.s32.totalorder %v533, %v551
        %vm553 = vcmp.lt.s32.totalorder %v534, %v551
        %vm554 = vcmp.lt.s32.totalorder %v535, %v551
        %vm555 = vcmp.lt.s32.totalorder %v536, %v551
        %vm556 = vcmp.lt.s32.totalorder %v537, %v551
        %vm557 = vcmp.lt.s32.totalorder %v538, %v551
        %vm558 = vcmp.lt.s32.totalorder %v539, %v551
        %vm559 = vcmp.lt.s32.totalorder %v540, %v551
        %vm560 = vcmp.lt.s32.totalorder %v541, %v551
        %vm561 = vcmp.lt.s32.totalorder %v542, %v551
        %vm562 = vcmp.lt.s32.totalorder %v543, %v551
        %vm563 = vcmp.lt.s32.totalorder %v544, %v551
        %vm564 = vcmp.lt.s32.totalorder %v545, %v551
        %vm565 = vcmp.lt.s32.totalorder %v546, %v551
        %vm566 = vcmp.lt.s32.totalorder %v547, %v551
        %vm567 = vcmp.lt.s32.totalorder %v548, %v551
        %v568 = vsel %vm552, %v516, 0.0
        %v569 = vsel %vm553, %v517, 0.0
        %v570 = vsel %vm554, %v518, 0.0
        %v571 = vsel %vm555, %v519, 0.0
        %v572 = vsel %vm556, %v520, 0.0
        %v573 = vsel %vm557, %v521, 0.0
        %v574 = vsel %vm558, %v522, 0.0
        %v575 = vsel %vm559, %v523, 0.0
        %v576 = vsel %vm560, %v524, 0.0
        %v577 = vsel %vm561, %v525, 0.0
        %v578 = vsel %vm562, %v526, 0.0
        %v579 = vsel %vm563, %v527, 0.0
        %v580 = vsel %vm564, %v528, 0.0
        %v581 = vsel %vm565, %v529, 0.0
        %v582 = vsel %vm566, %v530, 0.0
        %v583 = vsel %vm567, %v531, 0.0
        %v584 = vld [vmem:[%s1] sm:$0x7]
        %v585 = vld [vmem:[%s2] sm:$0x7]
        %587 = vset.pattern.permute.xlu0 0
        %588 = vperm.xlu0 %587, %v585
        %v589 = vpop.permute.xlu0 %588
        %vm591 = vcmask 64512
        %v593 = vsel %vm591, %v584, 0
        %v596 = vsel %vm591, %v568, 0
        %v599 = vsel %vm591, %v569, 0
        %v602 = vsel %vm591, %v570, 0
        %v605 = vsel %vm591, %v571, 0
        %v608 = vsel %vm591, %v572, 0
        %v611 = vsel %vm591, %v573, 0
        %v614 = vsel %vm591, %v574, 0
        %v617 = vsel %vm591, %v575, 0
        %v620 = vsel %vm591, %v576, 0
        %v623 = vsel %vm591, %v577, 0
        %v626 = vsel %vm591, %v578, 0
        %v629 = vsel %vm591, %v579, 0
        %v632 = vsel %vm591, %v580, 0
        %v635 = vsel %vm591, %v581, 0
        %v638 = vsel %vm591, %v582, 0
        %v641 = vsel %vm591, %v583, 0
        %643 = vmatprep.subr.mxu0 0.0
        %644 = vmatpush1.xpose.msra.mxu0 %v596
        %645 = vmatprep.subr.mxu0 0.0
        %646 = vmatpush1.xpose.msra.mxu0 %v599
        %647 = vmatprep.subr.mxu0 0.0
        %648 = vmatpush1.xpose.msra.mxu0 %v602
        %649 = vmatprep.subr.mxu0 0.0
        %650 = vmatpush1.xpose.msra.mxu0 %v605
        %651 = vmatprep.subr.mxu0 0.0
        %652 = vmatpush1.xpose.msra.mxu0 %v608
        %653 = vmatprep.subr.mxu0 0.0
        %654 = vmatpush1.xpose.msra.mxu0 %v611
        %655 = vmatprep.subr.mxu0 0.0
        %656 = vmatpush1.xpose.msra.mxu0 %v614
        %657 = vmatprep.subr.mxu0 0.0
        %658 = vmatpush1.xpose.msra.mxu0 %v617
        %659 = vmatprep.subr.mxu0 0.0
        %660 = vmatpush1.xpose.msra.mxu0 %v620
        %661 = vmatprep.subr.mxu0 0.0
        %662 = vmatpush1.xpose.msra.mxu0 %v623
        %663 = vmatprep.subr.mxu0 0.0
        %664 = vmatpush1.xpose.msra.mxu0 %v626
        %665 = vmatprep.subr.mxu0 0.0
        %666 = vmatpush1.xpose.msra.mxu0 %v629
        %667 = vmatprep.subr.mxu0 0.0
        %668 = vmatpush1.xpose.msra.mxu0 %v632
        %669 = vmatprep.subr.mxu0 0.0
        %670 = vmatpush1.xpose.msra.mxu0 %v635
        %671 = vmatprep.subr.mxu0 0.0
        %672 = vmatpush1.xpose.msra.mxu0 %v638
        %673 = vmatprep.subr.mxu0 0.0
        %674 = vmatpush1.xpose.msra.mxu0 %v641
        %675 = vmatprep.subr.mxu0 0.0
        %676 = vmatpush1.xpose.msra.mxu0 0.0
        %677 = vmatprep.subr.mxu0 0.0
        %678 = vmatpush1.xpose.msra.mxu0 0.0
        %679 = vmatprep.subr.mxu0 0.0
        %680 = vmatpush1.xpose.msra.mxu0 0.0
        %681 = vmatprep.subr.mxu0 0.0
        %682 = vmatpush1.xpose.msra.mxu0 0.0
        %683 = vmatprep.subr.mxu0 0.0
        %684 = vmatpush1.xpose.msra.mxu0 0.0
        %685 = vmatprep.subr.mxu0 0.0
        %686 = vmatpush1.xpose.msra.mxu0 0.0
        %687 = vmatprep.subr.mxu0 0.0
        %688 = vmatpush1.xpose.msra.mxu0 0.0
        %689 = vmatprep.subr.mxu0 0.0
        %690 = vmatpush1.xpose.msra.mxu0 0.0
        %691 = vmatprep.subr.mxu0 0.0
        %692 = vmatpush1.xpose.msra.mxu0 0.0
        %693 = vmatprep.subr.mxu0 0.0
        %694 = vmatpush1.xpose.msra.mxu0 0.0
        %695 = vmatprep.subr.mxu0 0.0
        %696 = vmatpush1.xpose.msra.mxu0 0.0
        %697 = vmatprep.subr.mxu0 0.0
        %698 = vmatpush1.xpose.msra.mxu0 0.0
        %699 = vmatprep.subr.mxu0 0.0
        %700 = vmatpush1.xpose.msra.mxu0 0.0
        %701 = vmatprep.subr.mxu0 0.0
        %702 = vmatpush1.xpose.msra.mxu0 0.0
        %703 = vmatprep.subr.mxu0 0.0
        %704 = vmatpush1.xpose.msra.mxu0 0.0
        %705 = vmatprep.subr.mxu0 0.0
        %706 = vmatpush1.xpose.msra.mxu0 0.0
        %707 = vmatprep.mubr.f32.mxu0 0.0
        %708 = vmatmul.mubr.f32.gmra.mrb[0].mxu0 %v593
        %v709 = vpop.f32.mrb[0].mxu0
        %v710 = vadd.f32 %v589, %v709
        %v711 = vpop.f32.mrb[0].mxu0
        %712 = vdwg.mxu0
        %v713 = vtanh.pop %v710
        %v714 = vld [vmem:[%s3] sm:$0xff]
        %v715 = vld [vmem:[%s3 + $0x8] sm:$0x1]
        %v716 = vld [vmem:[%s4] sm:$0xff]
        %v717 = vld [vmem:[%s4 + $0x8] sm:$0x1]
        %719 = vset.pattern.permute.xlu0 0
        %720 = vperm.xlu0 %719, %v714
        %v721 = vpop.permute.xlu0 %720
        %724 = vset.pattern.permute.xlu0 0
        %725 = vperm.xlu0 %724, %v715
        %v726 = vpop.permute.xlu0 %725
        %v728 = vlaneseq
        %v729 = vshrl.u32 %v728, 7
        %v730 = vsub.s32 0, %v729
        %v731 = vrot.slane %v713, %v730
        %v732 = vmul.f32 %v721, %v731
        %v733 = vmul.f32 %v726, %v731
        %734 = vset.pattern.permute.xlu0 1
        %735 = vperm.xlu0 %734, %v714
        %v736 = vpop.permute.xlu0 %735
        %738 = vset.pattern.permute.xlu0 1
        %739 = vperm.xlu0 %738, %v715
        %v740 = vpop.permute.xlu0 %739
        %v742 = vlaneseq
        %v743 = vshrl.u32 %v742, 7
        %v744 = vsub.s32 1, %v743
        %v745 = vrot.slane %v713, %v744
        %v746 = vmul.f32 %v736, %v745
        %v747 = vmul.f32 %v740, %v745
        %v748 = vadd.f32 %v732, %v746
        %v749 = vadd.f32 %v733, %v747
        %750 = vset.pattern.permute.xlu0 2
        %751 = vperm.xlu0 %750, %v714
        %v752 = vpop.permute.xlu0 %751
        %754 = vset.pattern.permute.xlu0 2
        %755 = vperm.xlu0 %754, %v715
        %v756 = vpop.permute.xlu0 %755
        %v758 = vlaneseq
        %v759 = vshrl.u32 %v758, 7
        %v760 = vsub.s32 2, %v759
        %v761 = vrot.slane %v713, %v760
        %v762 = vmul.f32 %v752, %v761
        %v763 = vmul.f32 %v756, %v761
        %v764 = vadd.f32 %v748, %v762
        %v765 = vadd.f32 %v749, %v763
        %767 = vset.pattern.permute.xlu0 0
        %768 = vperm.xlu0 %767, %v716
        %v769 = vpop.permute.xlu0 %768
        %772 = vset.pattern.permute.xlu0 0
        %773 = vperm.xlu0 %772, %v717
        %v774 = vpop.permute.xlu0 %773
        %v776 = vadd.f32 %v764, %v769
        %v777 = vadd.f32 %v765, %v774
        %v778 = vtanh.pop %v776
        %v779 = vtanh.pop %v777
        %v780 = vld [vmem:[%s5] sm:$0xff]
        %v781 = vld [vmem:[%s5 + $0x8] sm:$0xff]
        %v782 = vld [vmem:[%s5 + $0x10] sm:$0xff]
        %v783 = vld [vmem:[%s5 + $0x18] sm:$0xff]
        %v784 = vld [vmem:[%s5 + $0x20] sm:$0xff]
        %v785 = vld [vmem:[%s5 + $0x28] sm:$0xff]
        %v786 = vld [vmem:[%s5 + $0x30] sm:$0xff]
        %v787 = vld [vmem:[%s5 + $0x38] sm:$0xff]
        %v788 = vld [vmem:[%s6] sm:$0xff]
        %v789 = vld [vmem:[%s6 + $0x8] sm:$0xff]
        %v790 = vld [vmem:[%s6 + $0x10] sm:$0xff]
        %v791 = vld [vmem:[%s6 + $0x18] sm:$0xff]
        %v792 = vld [vmem:[%s6 + $0x20] sm:$0xff]
        %v793 = vld [vmem:[%s6 + $0x28] sm:$0xff]
        %v794 = vld [vmem:[%s6 + $0x30] sm:$0xff]
        %v795 = vld [vmem:[%s6 + $0x38] sm:$0xff]
        %797 = vset.pattern.permute.xlu0 0
        %798 = vperm.xlu0 %797, %v788
        %v799 = vpop.permute.xlu0 %798
        %802 = vset.pattern.permute.xlu0 0
        %803 = vperm.xlu0 %802, %v789
        %v804 = vpop.permute.xlu0 %803
        %807 = vset.pattern.permute.xlu0 0
        %808 = vperm.xlu0 %807, %v790
        %v809 = vpop.permute.xlu0 %808
        %812 = vset.pattern.permute.xlu0 0
        %813 = vperm.xlu0 %812, %v791
        %v814 = vpop.permute.xlu0 %813
        %817 = vset.pattern.permute.xlu0 0
        %818 = vperm.xlu0 %817, %v792
        %v819 = vpop.permute.xlu0 %818
        %822 = vset.pattern.permute.xlu0 0
        %823 = vperm.xlu0 %822, %v793
        %v824 = vpop.permute.xlu0 %823
        %827 = vset.pattern.permute.xlu0 0
        %828 = vperm.xlu0 %827, %v794
        %v829 = vpop.permute.xlu0 %828
        %832 = vset.pattern.permute.xlu0 0
        %833 = vperm.xlu0 %832, %v795
        %v834 = vpop.permute.xlu0 %833
        %vm836 = vcmask 72704
        %v838 = vsel %vm836, %v780, 0
        %v841 = vsel %vm836, %v781, 0
        %v844 = vsel %vm836, %v782, 0
        %v847 = vsel %vm836, %v783, 0
        %v850 = vsel %vm836, %v784, 0
        %v853 = vsel %vm836, %v785, 0
        %v856 = vsel %vm836, %v786, 0
        %v859 = vsel %vm836, %v787, 0
        %vm861 = vcmask 1040384
        %v863 = vsel %vm861, %v779, 0
        %865 = vmatprep.subr.mxu0 0.0
        %866 = vmatpush1.msra.mxu0 %v778
        %867 = vmatprep.subr.mxu0 0.0
        %868 = vmatpush1.msra.mxu0 %v863
        %869 = vmatprep.subr.mxu0 0.0
        %870 = vmatpush1.msra.mxu0 0.0
        %871 = vmatprep.subr.mxu0 0.0
        %872 = vmatpush1.msra.mxu0 0.0
        %873 = vmatprep.subr.mxu0 0.0
        %874 = vmatpush1.msra.mxu0 0.0
        %875 = vmatprep.subr.mxu0 0.0
        %876 = vmatpush1.msra.mxu0 0.0
        %877 = vmatprep.subr.mxu0 0.0
        %878 = vmatpush1.msra.mxu0 0.0
        %879 = vmatprep.subr.mxu0 0.0
        %880 = vmatpush1.msra.mxu0 0.0
        %881 = vmatprep.subr.mxu0 0.0
        %882 = vmatpush1.msra.mxu0 0.0
        %883 = vmatprep.subr.mxu0 0.0
        %884 = vmatpush1.msra.mxu0 0.0
        %885 = vmatprep.subr.mxu0 0.0
        %886 = vmatpush1.msra.mxu0 0.0
        %887 = vmatprep.subr.mxu0 0.0
        %888 = vmatpush1.msra.mxu0 0.0
        %889 = vmatprep.subr.mxu0 0.0
        %890 = vmatpush1.msra.mxu0 0.0
        %891 = vmatprep.subr.mxu0 0.0
        %892 = vmatpush1.msra.mxu0 0.0
        %893 = vmatprep.subr.mxu0 0.0
        %894 = vmatpush1.msra.mxu0 0.0
        %895 = vmatprep.subr.mxu0 0.0
        %896 = vmatpush1.msra.mxu0 0.0
        %897 = vmatprep.subr.mxu0 0.0
        %898 = vmatpush1.msra.mxu0 0.0
        %899 = vmatprep.subr.mxu0 0.0
        %900 = vmatpush1.msra.mxu0 0.0
        %901 = vmatprep.subr.mxu0 0.0
        %902 = vmatpush1.msra.mxu0 0.0
        %903 = vmatprep.subr.mxu0 0.0
        %904 = vmatpush1.msra.mxu0 0.0
        %905 = vmatprep.subr.mxu0 0.0
        %906 = vmatpush1.msra.mxu0 0.0
        %907 = vmatprep.subr.mxu0 0.0
        %908 = vmatpush1.msra.mxu0 0.0
        %909 = vmatprep.subr.mxu0 0.0
        %910 = vmatpush1.msra.mxu0 0.0
        %911 = vmatprep.subr.mxu0 0.0
        %912 = vmatpush1.msra.mxu0 0.0
        %913 = vmatprep.subr.mxu0 0.0
        %914 = vmatpush1.msra.mxu0 0.0
        %915 = vmatprep.subr.mxu0 0.0
        %916 = vmatpush1.msra.mxu0 0.0
        %917 = vmatprep.subr.mxu0 0.0
        %918 = vmatpush1.msra.mxu0 0.0
        %919 = vmatprep.subr.mxu0 0.0
        %920 = vmatpush1.msra.mxu0 0.0
        %921 = vmatprep.subr.mxu0 0.0
        %922 = vmatpush1.msra.mxu0 0.0
        %923 = vmatprep.subr.mxu0 0.0
        %924 = vmatpush1.msra.mxu0 0.0
        %925 = vmatprep.subr.mxu0 0.0
        %926 = vmatpush1.msra.mxu0 0.0
        %927 = vmatprep.subr.mxu0 0.0
        %928 = vmatpush1.msra.mxu0 0.0
        %929 = vmatprep.mubr.f32.mxu0 0.0
        %930 = vmatmul.mubr.f32.gmra.mrb[0].mxu0 %v838
        %v931 = vpop.f32.mrb[0].mxu0
        %v932 = vadd.f32 %v799, %v931
        %v933 = vpop.f32.mrb[0].mxu0
        %934 = vmatprep.mubr.f32.mxu0 0.0
        %935 = vmatmul.mubr.f32.gmra.mrb[0].mxu0 %v841
        %v936 = vpop.f32.mrb[0].mxu0
        %v937 = vadd.f32 %v804, %v936
        %v938 = vpop.f32.mrb[0].mxu0
        %939 = vmatprep.mubr.f32.mxu0 0.0
        %940 = vmatmul.mubr.f32.gmra.mrb[0].mxu0 %v844
        %v941 = vpop.f32.mrb[0].mxu0
        %v942 = vadd.f32 %v809, %v941
        %v943 = vpop.f32.mrb[0].mxu0
        %944 = vmatprep.mubr.f32.mxu0 0.0
        %945 = vmatmul.mubr.f32.gmra.mrb[0].mxu0 %v847
        %v946 = vpop.f32.mrb[0].mxu0
        %v947 = vadd.f32 %v814, %v946
        %v948 = vpop.f32.mrb[0].mxu0
        %949 = vmatprep.mubr.f32.mxu0 0.0
        %950 = vmatmul.mubr.f32.gmra.mrb[0].mxu0 %v850
        %v951 = vpop.f32.mrb[0].mxu0
        %v952 = vadd.f32 %v819, %v951
        %v953 = vpop.f32.mrb[0].mxu0
        %954 = vmatprep.mubr.f32.mxu0 0.0
        %955 = vmatmul.mubr.f32.gmra.mrb[0].mxu0 %v853
        %v956 = vpop.f32.mrb[0].mxu0
        %v957 = vadd.f32 %v824, %v956
        %v958 = vpop.f32.mrb[0].mxu0
        %959 = vmatprep.mubr.f32.mxu0 0.0
        %960 = vmatmul.mubr.f32.gmra.mrb[0].mxu0 %v856
        %v961 = vpop.f32.mrb[0].mxu0
        %v962 = vadd.f32 %v829, %v961
        %v963 = vpop.f32.mrb[0].mxu0
        %964 = vmatprep.mubr.f32.mxu0 0.0
        %965 = vmatmul.mubr.f32.gmra.mrb[0].mxu0 %v859
        %v966 = vpop.f32.mrb[0].mxu0
        %v967 = vadd.f32 %v834, %v966
        %v968 = vpop.f32.mrb[0].mxu0
        %969 = vdwg.mxu0
        %v970 = vtanh.pop %v932
        %v971 = vtanh.pop %v937
        %v972 = vtanh.pop %v942
        %v973 = vtanh.pop %v947
        %v974 = vtanh.pop %v952
        %v975 = vtanh.pop %v957
        %v976 = vtanh.pop %v962
        %v977 = vtanh.pop %v967
        %v978 = vld [vmem:[%s7] sm:$0xff]
        %v979 = vld [vmem:[%s7 + $0x8] sm:$0xff]
        %v980 = vld [vmem:[%s7 + $0x10] sm:$0xff]
        %v981 = vld [vmem:[%s7 + $0x18] sm:$0xff]
        %v982 = vld [vmem:[%s7 + $0x20] sm:$0xff]
        %v983 = vld [vmem:[%s7 + $0x28] sm:$0xff]
        %v984 = vld [vmem:[%s7 + $0x30] sm:$0xff]
        %v985 = vld [vmem:[%s7 + $0x38] sm:$0xff]
        %v986 = vld [vmem:[%s7 + $0x40] sm:$0xff]
        %v987 = vld [vmem:[%s7 + $0x48] sm:$0xff]
        %v988 = vld [vmem:[%s7 + $0x50] sm:$0xff]
        %v989 = vld [vmem:[%s7 + $0x58] sm:$0xff]
        %v990 = vld [vmem:[%s7 + $0x60] sm:$0xff]
        %v991 = vld [vmem:[%s7 + $0x68] sm:$0xff]
        %v992 = vld [vmem:[%s7 + $0x70] sm:$0xff]
        %v993 = vld [vmem:[%s7 + $0x78] sm:$0xff]
        %v994 = vld [vmem:[%s7 + $0x80] sm:$0xff]
        %v995 = vld [vmem:[%s7 + $0x88] sm:$0xff]
        %v996 = vld [vmem:[%s7 + $0x90] sm:$0xff]
        %v997 = vld [vmem:[%s7 + $0x98] sm:$0xff]
        %v998 = vld [vmem:[%s7 + $0xa0] sm:$0xff]
        %v999 = vld [vmem:[%s7 + $0xa8] sm:$0xff]
        %v1000 = vld [vmem:[%s7 + $0xb0] sm:$0xff]
        %v1001 = vld [vmem:[%s7 + $0xb8] sm:$0xff]
        %v1002 = vld [vmem:[%s7 + $0xc0] sm:$0xff]
        %v1003 = vld [vmem:[%s7 + $0xc8] sm:$0xff]
        %v1004 = vld [vmem:[%s7 + $0xd0] sm:$0xff]
        %v1005 = vld [vmem:[%s7 + $0xd8] sm:$0xff]
        %v1006 = vld [vmem:[%s7 + $0xe0] sm:$0xff]
        %v1007 = vld [vmem:[%s7 + $0xe8] sm:$0xff]
        %v1008 = vld [vmem:[%s7 + $0xf0] sm:$0xff]
        %v1009 = vld [vmem:[%s7 + $0xf8] sm:$0xff]
        %v1010 = vld [vmem:[%s8] sm:$0xff]
        %v1011 = vld [vmem:[%s8 + $0x8] sm:$0xff]
        %v1012 = vld [vmem:[%s8 + $0x10] sm:$0xff]
        %v1013 = vld [vmem:[%s8 + $0x18] sm:$0xff]
        %v1014 = vld [vmem:[%s8 + $0x20] sm:$0xff]
        %v1015 = vld [vmem:[%s8 + $0x28] sm:$0xff]
        %v1016 = vld [vmem:[%s8 + $0x30] sm:$0xff]
        %v1017 = vld [vmem:[%s8 + $0x38] sm:$0xff]
        %v1018 = vld [vmem:[%s8 + $0x40] sm:$0xff]
        %v1019 = vld [vmem:[%s8 + $0x48] sm:$0xff]
        %v1020 = vld [vmem:[%s8 + $0x50] sm:$0xff]
        %v1021 = vld [vmem:[%s8 + $0x58] sm:$0xff]
        %v1022 = vld [vmem:[%s8 + $0x60] sm:$0xff]
        %v1023 = vld [vmem:[%s8 + $0x68] sm:$0xff]
        %v1024 = vld [vmem:[%s8 + $0x70] sm:$0xff]
        %v1025 = vld [vmem:[%s8 + $0x78] sm:$0xff]
        %v1026 = vld [vmem:[%s8 + $0x80] sm:$0xff]
        %v1027 = vld [vmem:[%s8 + $0x88] sm:$0xff]
        %v1028 = vld [vmem:[%s8 + $0x90] sm:$0xff]
        %v1029 = vld [vmem:[%s8 + $0x98] sm:$0xff]
        %v1030 = vld [vmem:[%s8 + $0xa0] sm:$0xff]
        %v1031 = vld [vmem:[%s8 + $0xa8] sm:$0xff]
        %v1032 = vld [vmem:[%s8 + $0xb0] sm:$0xff]
        %v1033 = vld [vmem:[%s8 + $0xb8] sm:$0xff]
        %v1034 = vld [vmem:[%s8 + $0xc0] sm:$0xff]
        %v1035 = vld [vmem:[%s8 + $0xc8] sm:$0xff]
        %v1036 = vld [vmem:[%s8 + $0xd0] sm:$0xff]
        %v1037 = vld [vmem:[%s8 + $0xd8] sm:$0xff]
        %v1038 = vld [vmem:[%s8 + $0xe0] sm:$0xff]
        %v1039 = vld [vmem:[%s8 + $0xe8] sm:$0xff]
        %v1040 = vld [vmem:[%s8 + $0xf0] sm:$0xff]
        %v1041 = vld [vmem:[%s8 + $0xf8] sm:$0xff]
        %1043 = vset.pattern.permute.xlu0 0
        %1044 = vperm.xlu0 %1043, %v1010
        %v1045 = vpop.permute.xlu0 %1044
        %1048 = vset.pattern.permute.xlu0 0
        %1049 = vperm.xlu0 %1048, %v1011
        %v1050 = vpop.permute.xlu0 %1049
        %1053 = vset.pattern.permute.xlu0 0
        %1054 = vperm.xlu0 %1053, %v1012
        %v1055 = vpop.permute.xlu0 %1054
        %1058 = vset.pattern.permute.xlu0 0
        %1059 = vperm.xlu0 %1058, %v1013
        %v1060 = vpop.permute.xlu0 %1059
        %1063 = vset.pattern.permute.xlu0 0
        %1064 = vperm.xlu0 %1063, %v1014
        %v1065 = vpop.permute.xlu0 %1064
        %1068 = vset.pattern.permute.xlu0 0
        %1069 = vperm.xlu0 %1068, %v1015
        %v1070 = vpop.permute.xlu0 %1069
        %1073 = vset.pattern.permute.xlu0 0
        %1074 = vperm.xlu0 %1073, %v1016
        %v1075 = vpop.permute.xlu0 %1074
        %1078 = vset.pattern.permute.xlu0 0
        %1079 = vperm.xlu0 %1078, %v1017
        %v1080 = vpop.permute.xlu0 %1079
        %1083 = vset.pattern.permute.xlu0 0
        %1084 = vperm.xlu0 %1083, %v1018
        %v1085 = vpop.permute.xlu0 %1084
        %1088 = vset.pattern.permute.xlu0 0
        %1089 = vperm.xlu0 %1088, %v1019
        %v1090 = vpop.permute.xlu0 %1089
        %1093 = vset.pattern.permute.xlu0 0
        %1094 = vperm.xlu0 %1093, %v1020
        %v1095 = vpop.permute.xlu0 %1094
        %1098 = vset.pattern.permute.xlu0 0
        %1099 = vperm.xlu0 %1098, %v1021
        %v1100 = vpop.permute.xlu0 %1099
        %1103 = vset.pattern.permute.xlu0 0
        %1104 = vperm.xlu0 %1103, %v1022
        %v1105 = vpop.permute.xlu0 %1104
        %1108 = vset.pattern.permute.xlu0 0
        %1109 = vperm.xlu0 %1108, %v1023
        %v1110 = vpop.permute.xlu0 %1109
        %1113 = vset.pattern.permute.xlu0 0
        %1114 = vperm.xlu0 %1113, %v1024
        %v1115 = vpop.permute.xlu0 %1114
        %1118 = vset.pattern.permute.xlu0 0
        %1119 = vperm.xlu0 %1118, %v1025
        %v1120 = vpop.permute.xlu0 %1119
        %1123 = vset.pattern.permute.xlu0 0
        %1124 = vperm.xlu0 %1123, %v1026
        %v1125 = vpop.permute.xlu0 %1124
        %1128 = vset.pattern.permute.xlu0 0
        %1129 = vperm.xlu0 %1128, %v1027
        %v1130 = vpop.permute.xlu0 %1129
        %1133 = vset.pattern.permute.xlu0 0
        %1134 = vperm.xlu0 %1133, %v1028
        %v1135 = vpop.permute.xlu0 %1134
        %1138 = vset.pattern.permute.xlu0 0
        %1139 = vperm.xlu0 %1138, %v1029
        %v1140 = vpop.permute.xlu0 %1139
        %1143 = vset.pattern.permute.xlu0 0
        %1144 = vperm.xlu0 %1143, %v1030
        %v1145 = vpop.permute.xlu0 %1144
        %1148 = vset.pattern.permute.xlu0 0
        %1149 = vperm.xlu0 %1148, %v1031
        %v1150 = vpop.permute.xlu0 %1149
        %1153 = vset.pattern.permute.xlu0 0
        %1154 = vperm.xlu0 %1153, %v1032
        %v1155 = vpop.permute.xlu0 %1154
        %1158 = vset.pattern.permute.xlu0 0
        %1159 = vperm.xlu0 %1158, %v1033
        %v1160 = vpop.permute.xlu0 %1159
        %1163 = vset.pattern.permute.xlu0 0
        %1164 = vperm.xlu0 %1163, %v1034
        %v1165 = vpop.permute.xlu0 %1164
        %1168 = vset.pattern.permute.xlu0 0
        %1169 = vperm.xlu0 %1168, %v1035
        %v1170 = vpop.permute.xlu0 %1169
        %1173 = vset.pattern.permute.xlu0 0
        %1174 = vperm.xlu0 %1173, %v1036
        %v1175 = vpop.permute.xlu0 %1174
        %1178 = vset.pattern.permute.xlu0 0
        %1179 = vperm.xlu0 %1178, %v1037
        %v1180 = vpop.permute.xlu0 %1179
        %1183 = vset.pattern.permute.xlu0 0
        %1184 = vperm.xlu0 %1183, %v1038
        %v1185 = vpop.permute.xlu0 %1184
        %1188 = vset.pattern.permute.xlu0 0
        %1189 = vperm.xlu0 %1188, %v1039
        %v1190 = vpop.permute.xlu0 %1189
        %1193 = vset.pattern.permute.xlu0 0
        %1194 = vperm.xlu0 %1193, %v1040
        %v1195 = vpop.permute.xlu0 %1194
        %1198 = vset.pattern.permute.xlu0 0
        %1199 = vperm.xlu0 %1198, %v1041
        %v1200 = vpop.permute.xlu0 %1199
        %vm1202 = vcmask 523264
        %v1204 = vsel %vm1202, %v978, 0
        %v1207 = vsel %vm1202, %v979, 0
        %v1210 = vsel %vm1202, %v980, 0
        %v1213 = vsel %vm1202, %v981, 0
        %v1216 = vsel %vm1202, %v982, 0
        %v1219 = vsel %vm1202, %v983, 0
        %v1222 = vsel %vm1202, %v984, 0
        %v1225 = vsel %vm1202, %v985, 0
        %v1228 = vsel %vm1202, %v986, 0
        %v1231 = vsel %vm1202, %v987, 0
        %v1234 = vsel %vm1202, %v988, 0
        %v1237 = vsel %vm1202, %v989, 0
        %v1240 = vsel %vm1202, %v990, 0
        %v1243 = vsel %vm1202, %v991, 0
        %v1246 = vsel %vm1202, %v992, 0
        %v1249 = vsel %vm1202, %v993, 0
        %v1252 = vsel %vm1202, %v994, 0
        %v1255 = vsel %vm1202, %v995, 0
        %v1258 = vsel %vm1202, %v996, 0
        %v1261 = vsel %vm1202, %v997, 0
        %v1264 = vsel %vm1202, %v998, 0
        %v1267 = vsel %vm1202, %v999, 0
        %v1270 = vsel %vm1202, %v1000, 0
        %v1273 = vsel %vm1202, %v1001, 0
        %v1276 = vsel %vm1202, %v1002, 0
        %v1279 = vsel %vm1202, %v1003, 0
        %v1282 = vsel %vm1202, %v1004, 0
        %v1285 = vsel %vm1202, %v1005, 0
        %v1288 = vsel %vm1202, %v1006, 0
        %v1291 = vsel %vm1202, %v1007, 0
        %v1294 = vsel %vm1202, %v1008, 0
        %v1297 = vsel %vm1202, %v1009, 0
        %1299 = vmatprep.subr.mxu0 0.0
        %1300 = vmatpush1.msra.mxu0 %v970
        %1301 = vmatprep.subr.mxu0 0.0
        %1302 = vmatpush1.msra.mxu0 %v971
        %1303 = vmatprep.subr.mxu0 0.0
        %1304 = vmatpush1.msra.mxu0 %v972
        %1305 = vmatprep.subr.mxu0 0.0
        %1306 = vmatpush1.msra.mxu0 %v973
        %1307 = vmatprep.subr.mxu0 0.0
        %1308 = vmatpush1.msra.mxu0 %v974
        %1309 = vmatprep.subr.mxu0 0.0
        %1310 = vmatpush1.msra.mxu0 %v975
        %1311 = vmatprep.subr.mxu0 0.0
        %1312 = vmatpush1.msra.mxu0 %v976
        %1313 = vmatprep.subr.mxu0 0.0
        %1314 = vmatpush1.msra.mxu0 %v977
        %1315 = vmatprep.subr.mxu0 0.0
        %1316 = vmatpush1.msra.mxu0 0.0
        %1317 = vmatprep.subr.mxu0 0.0
        %1318 = vmatpush1.msra.mxu0 0.0
        %1319 = vmatprep.subr.mxu0 0.0
        %1320 = vmatpush1.msra.mxu0 0.0
        %1321 = vmatprep.subr.mxu0 0.0
        %1322 = vmatpush1.msra.mxu0 0.0
        %1323 = vmatprep.subr.mxu0 0.0
        %1324 = vmatpush1.msra.mxu0 0.0
        %1325 = vmatprep.subr.mxu0 0.0
        %1326 = vmatpush1.msra.mxu0 0.0
        %1327 = vmatprep.subr.mxu0 0.0
        %1328 = vmatpush1.msra.mxu0 0.0
        %1329 = vmatprep.subr.mxu0 0.0
        %1330 = vmatpush1.msra.mxu0 0.0
        %1331 = vmatprep.subr.mxu0 0.0
        %1332 = vmatpush1.msra.mxu0 0.0
        %1333 = vmatprep.subr.mxu0 0.0
        %1334 = vmatpush1.msra.mxu0 0.0
        %1335 = vmatprep.subr.mxu0 0.0
        %1336 = vmatpush1.msra.mxu0 0.0
        %1337 = vmatprep.subr.mxu0 0.0
        %1338 = vmatpush1.msra.mxu0 0.0
        %1339 = vmatprep.subr.mxu0 0.0
        %1340 = vmatpush1.msra.mxu0 0.0
        %1341 = vmatprep.subr.mxu0 0.0
        %1342 = vmatpush1.msra.mxu0 0.0
        %1343 = vmatprep.subr.mxu0 0.0
        %1344 = vmatpush1.msra.mxu0 0.0
        %1345 = vmatprep.subr.mxu0 0.0
        %1346 = vmatpush1.msra.mxu0 0.0
        %1347 = vmatprep.subr.mxu0 0.0
        %1348 = vmatpush1.msra.mxu0 0.0
        %1349 = vmatprep.subr.mxu0 0.0
        %1350 = vmatpush1.msra.mxu0 0.0
        %1351 = vmatprep.subr.mxu0 0.0
        %1352 = vmatpush1.msra.mxu0 0.0
        %1353 = vmatprep.subr.mxu0 0.0
        %1354 = vmatpush1.msra.mxu0 0.0
        %1355 = vmatprep.subr.mxu0 0.0
        %1356 = vmatpush1.msra.mxu0 0.0
        %1357 = vmatprep.subr.mxu0 0.0
        %1358 = vmatpush1.msra.mxu0 0.0
        %1359 = vmatprep.subr.mxu0 0.0
        %1360 = vmatpush1.msra.mxu0 0.0
        %1361 = vmatprep.subr.mxu0 0.0
        %1362 = vmatpush1.msra.mxu0 0.0
        %1363 = vmatprep.mubr.f32.mxu0 0.0
        %1364 = vmatmul.mubr.f32.gmra.mrb[0].mxu0 %v1204
        %v1365 = vpop.f32.mrb[0].mxu0
        %v1366 = vadd.f32 %v1045, %v1365
        %v1367 = vpop.f32.mrb[0].mxu0
        %1368 = vmatprep.mubr.f32.mxu0 0.0
        %1369 = vmatmul.mubr.f32.gmra.mrb[0].mxu0 %v1207
        %v1370 = vpop.f32.mrb[0].mxu0
        %v1371 = vadd.f32 %v1050, %v1370
        %v1372 = vpop.f32.mrb[0].mxu0
        %1373 = vmatprep.mubr.f32.mxu0 0.0
        %1374 = vmatmul.mubr.f32.gmra.mrb[0].mxu0 %v1210
        %v1375 = vpop.f32.mrb[0].mxu0
        %v1376 = vadd.f32 %v1055, %v1375
        %v1377 = vpop.f32.mrb[0].mxu0
        %1378 = vmatprep.mubr.f32.mxu0 0.0
        %1379 = vmatmul.mubr.f32.gmra.mrb[0].mxu0 %v1213
        %v1380 = vpop.f32.mrb[0].mxu0
        %v1381 = vadd.f32 %v1060, %v1380
        %v1382 = vpop.f32.mrb[0].mxu0
        %1383 = vmatprep.mubr.f32.mxu0 0.0
        %1384 = vmatmul.mubr.f32.gmra.mrb[0].mxu0 %v1216
        %v1385 = vpop.f32.mrb[0].mxu0
        %v1386 = vadd.f32 %v1065, %v1385
        %v1387 = vpop.f32.mrb[0].mxu0
        %1388 = vmatprep.mubr.f32.mxu0 0.0
        %1389 = vmatmul.mubr.f32.gmra.mrb[0].mxu0 %v1219
        %v1390 = vpop.f32.mrb[0].mxu0
        %v1391 = vadd.f32 %v1070, %v1390
        %v1392 = vpop.f32.mrb[0].mxu0
        %1393 = vmatprep.mubr.f32.mxu0 0.0
        %1394 = vmatmul.mubr.f32.gmra.mrb[0].mxu0 %v1222
        %v1395 = vpop.f32.mrb[0].mxu0
        %v1396 = vadd.f32 %v1075, %v1395
        %v1397 = vpop.f32.mrb[0].mxu0
        %1398 = vmatprep.mubr.f32.mxu0 0.0
        %1399 = vmatmul.mubr.f32.gmra.mrb[0].mxu0 %v1225
        %v1400 = vpop.f32.mrb[0].mxu0
        %v1401 = vadd.f32 %v1080, %v1400
        %v1402 = vpop.f32.mrb[0].mxu0
        %1403 = vmatprep.mubr.f32.mxu0 0.0
        %1404 = vmatmul.mubr.f32.gmra.mrb[0].mxu0 %v1228
        %v1405 = vpop.f32.mrb[0].mxu0
        %v1406 = vadd.f32 %v1085, %v1405
        %v1407 = vpop.f32.mrb[0].mxu0
        %1408 = vmatprep.mubr.f32.mxu0 0.0
        %1409 = vmatmul.mubr.f32.gmra.mrb[0].mxu0 %v1231
        %v1410 = vpop.f32.mrb[0].mxu0
        %v1411 = vadd.f32 %v1090, %v1410
        %v1412 = vpop.f32.mrb[0].mxu0
        %1413 = vmatprep.mubr.f32.mxu0 0.0
        %1414 = vmatmul.mubr.f32.gmra.mrb[0].mxu0 %v1234
        %v1415 = vpop.f32.mrb[0].mxu0
        %v1416 = vadd.f32 %v1095, %v1415
        %v1417 = vpop.f32.mrb[0].mxu0
        %1418 = vmatprep.mubr.f32.mxu0 0.0
        %1419 = vmatmul.mubr.f32.gmra.mrb[0].mxu0 %v1237
        %v1420 = vpop.f32.mrb[0].mxu0
        %v1421 = vadd.f32 %v1100, %v1420
        %v1422 = vpop.f32.mrb[0].mxu0
        %1423 = vmatprep.mubr.f32.mxu0 0.0
        %1424 = vmatmul.mubr.f32.gmra.mrb[0].mxu0 %v1240
        %v1425 = vpop.f32.mrb[0].mxu0
        %v1426 = vadd.f32 %v1105, %v1425
        %v1427 = vpop.f32.mrb[0].mxu0
        %1428 = vmatprep.mubr.f32.mxu0 0.0
        %1429 = vmatmul.mubr.f32.gmra.mrb[0].mxu0 %v1243
        %v1430 = vpop.f32.mrb[0].mxu0
        %v1431 = vadd.f32 %v1110, %v1430
        %v1432 = vpop.f32.mrb[0].mxu0
        %1433 = vmatprep.mubr.f32.mxu0 0.0
        %1434 = vmatmul.mubr.f32.gmra.mrb[0].mxu0 %v1246
        %v1435 = vpop.f32.mrb[0].mxu0
        %v1436 = vadd.f32 %v1115, %v1435
        %v1437 = vpop.f32.mrb[0].mxu0
        %1438 = vmatprep.mubr.f32.mxu0 0.0
        %1439 = vmatmul.mubr.f32.gmra.mrb[0].mxu0 %v1249
        %v1440 = vpop.f32.mrb[0].mxu0
        %v1441 = vadd.f32 %v1120, %v1440
        %v1442 = vpop.f32.mrb[0].mxu0
        %1443 = vmatprep.mubr.f32.mxu0 0.0
        %1444 = vmatmul.mubr.f32.gmra.mrb[0].mxu0 %v1252
        %v1445 = vpop.f32.mrb[0].mxu0
        %v1446 = vadd.f32 %v1125, %v1445
        %v1447 = vpop.f32.mrb[0].mxu0
        %1448 = vmatprep.mubr.f32.mxu0 0.0
        %1449 = vmatmul.mubr.f32.gmra.mrb[0].mxu0 %v1255
        %v1450 = vpop.f32.mrb[0].mxu0
        %v1451 = vadd.f32 %v1130, %v1450
        %v1452 = vpop.f32.mrb[0].mxu0
        %1453 = vmatprep.mubr.f32.mxu0 0.0
        %1454 = vmatmul.mubr.f32.gmra.mrb[0].mxu0 %v1258
        %v1455 = vpop.f32.mrb[0].mxu0
        %v1456 = vadd.f32 %v1135, %v1455
        %v1457 = vpop.f32.mrb[0].mxu0
        %1458 = vmatprep.mubr.f32.mxu0 0.0
        %1459 = vmatmul.mubr.f32.gmra.mrb[0].mxu0 %v1261
        %v1460 = vpop.f32.mrb[0].mxu0
        %v1461 = vadd.f32 %v1140, %v1460
        %v1462 = vpop.f32.mrb[0].mxu0
        %1463 = vmatprep.mubr.f32.mxu0 0.0
        %1464 = vmatmul.mubr.f32.gmra.mrb[0].mxu0 %v1264
        %v1465 = vpop.f32.mrb[0].mxu0
        %v1466 = vadd.f32 %v1145, %v1465
        %v1467 = vpop.f32.mrb[0].mxu0
        %1468 = vmatprep.mubr.f32.mxu0 0.0
        %1469 = vmatmul.mubr.f32.gmra.mrb[0].mxu0 %v1267
        %v1470 = vpop.f32.mrb[0].mxu0
        %v1471 = vadd.f32 %v1150, %v1470
        %v1472 = vpop.f32.mrb[0].mxu0
        %1473 = vmatprep.mubr.f32.mxu0 0.0
        %1474 = vmatmul.mubr.f32.gmra.mrb[0].mxu0 %v1270
        %v1475 = vpop.f32.mrb[0].mxu0
        %v1476 = vadd.f32 %v1155, %v1475
        %v1477 = vpop.f32.mrb[0].mxu0
        %1478 = vmatprep.mubr.f32.mxu0 0.0
        %1479 = vmatmul.mubr.f32.gmra.mrb[0].mxu0 %v1273
        %v1480 = vpop.f32.mrb[0].mxu0
        %v1481 = vadd.f32 %v1160, %v1480
        %v1482 = vpop.f32.mrb[0].mxu0
        %1483 = vmatprep.mubr.f32.mxu0 0.0
        %1484 = vmatmul.mubr.f32.gmra.mrb[0].mxu0 %v1276
        %v1485 = vpop.f32.mrb[0].mxu0
        %v1486 = vadd.f32 %v1165, %v1485
        %v1487 = vpop.f32.mrb[0].mxu0
        %1488 = vmatprep.mubr.f32.mxu0 0.0
        %1489 = vmatmul.mubr.f32.gmra.mrb[0].mxu0 %v1279
        %v1490 = vpop.f32.mrb[0].mxu0
        %v1491 = vadd.f32 %v1170, %v1490
        %v1492 = vpop.f32.mrb[0].mxu0
        %1493 = vmatprep.mubr.f32.mxu0 0.0
        %1494 = vmatmul.mubr.f32.gmra.mrb[0].mxu0 %v1282
        %v1495 = vpop.f32.mrb[0].mxu0
        %v1496 = vadd.f32 %v1175, %v1495
        %v1497 = vpop.f32.mrb[0].mxu0
        %1498 = vmatprep.mubr.f32.mxu0 0.0
        %1499 = vmatmul.mubr.f32.gmra.mrb[0].mxu0 %v1285
        %v1500 = vpop.f32.mrb[0].mxu0
        %v1501 = vadd.f32 %v1180, %v1500
        %v1502 = vpop.f32.mrb[0].mxu0
        %1503 = vmatprep.mubr.f32.mxu0 0.0
        %1504 = vmatmul.mubr.f32.gmra.mrb[0].mxu0 %v1288
        %v1505 = vpop.f32.mrb[0].mxu0
        %v1506 = vadd.f32 %v1185, %v1505
        %v1507 = vpop.f32.mrb[0].mxu0
        %1508 = vmatprep.mubr.f32.mxu0 0.0
        %1509 = vmatmul.mubr.f32.gmra.mrb[0].mxu0 %v1291
        %v1510 = vpop.f32.mrb[0].mxu0
        %v1511 = vadd.f32 %v1190, %v1510
        %v1512 = vpop.f32.mrb[0].mxu0
        %1513 = vmatprep.mubr.f32.mxu0 0.0
        %1514 = vmatmul.mubr.f32.gmra.mrb[0].mxu0 %v1294
        %v1515 = vpop.f32.mrb[0].mxu0
        %v1516 = vadd.f32 %v1195, %v1515
        %v1517 = vpop.f32.mrb[0].mxu0
        %1518 = vmatprep.mubr.f32.mxu0 0.0
        %1519 = vmatmul.mubr.f32.gmra.mrb[0].mxu0 %v1297
        %v1520 = vpop.f32.mrb[0].mxu0
        %v1521 = vadd.f32 %v1200, %v1520
        %v1522 = vpop.f32.mrb[0].mxu0
        %1523 = vdwg.mxu0
        %v1524 = vtanh.pop %v1366
        %v1525 = vtanh.pop %v1371
        %v1526 = vtanh.pop %v1376
        %v1527 = vtanh.pop %v1381
        %v1528 = vtanh.pop %v1386
        %v1529 = vtanh.pop %v1391
        %v1530 = vtanh.pop %v1396
        %v1531 = vtanh.pop %v1401
        %v1532 = vtanh.pop %v1406
        %v1533 = vtanh.pop %v1411
        %v1534 = vtanh.pop %v1416
        %v1535 = vtanh.pop %v1421
        %v1536 = vtanh.pop %v1426
        %v1537 = vtanh.pop %v1431
        %v1538 = vtanh.pop %v1436
        %v1539 = vtanh.pop %v1441
        %v1540 = vtanh.pop %v1446
        %v1541 = vtanh.pop %v1451
        %v1542 = vtanh.pop %v1456
        %v1543 = vtanh.pop %v1461
        %v1544 = vtanh.pop %v1466
        %v1545 = vtanh.pop %v1471
        %v1546 = vtanh.pop %v1476
        %v1547 = vtanh.pop %v1481
        %v1548 = vtanh.pop %v1486
        %v1549 = vtanh.pop %v1491
        %v1550 = vtanh.pop %v1496
        %v1551 = vtanh.pop %v1501
        %v1552 = vtanh.pop %v1506
        %v1553 = vtanh.pop %v1511
        %v1554 = vtanh.pop %v1516
        %v1555 = vtanh.pop %v1521
        %v1556 = vld [vmem:[%s9] sm:$0xff]
        %v1557 = vld [vmem:[%s9 + $0x8] sm:$0xff]
        %v1558 = vld [vmem:[%s9 + $0x10] sm:$0xff]
        %v1559 = vld [vmem:[%s9 + $0x18] sm:$0xff]
        %v1560 = vld [vmem:[%s9 + $0x20] sm:$0xff]
        %v1561 = vld [vmem:[%s9 + $0x28] sm:$0xff]
        %v1562 = vld [vmem:[%s9 + $0x30] sm:$0xff]
        %v1563 = vld [vmem:[%s9 + $0x38] sm:$0xff]
        %v1564 = vld [vmem:[%s9 + $0x40] sm:$0xff]
        %v1565 = vld [vmem:[%s9 + $0x48] sm:$0xff]
        %v1566 = vld [vmem:[%s9 + $0x50] sm:$0xff]
        %v1567 = vld [vmem:[%s9 + $0x58] sm:$0xff]
        %v1568 = vld [vmem:[%s9 + $0x60] sm:$0xff]
        %v1569 = vld [vmem:[%s9 + $0x68] sm:$0xff]
        %v1570 = vld [vmem:[%s9 + $0x70] sm:$0xff]
        %v1571 = vld [vmem:[%s9 + $0x78] sm:$0xff]
        %v1572 = vld [vmem:[%s10] sm:$0xff]
        %v1573 = vld [vmem:[%s10 + $0x8] sm:$0xff]
        %v1574 = vld [vmem:[%s10 + $0x10] sm:$0xff]
        %v1575 = vld [vmem:[%s10 + $0x18] sm:$0xff]
        %v1576 = vld [vmem:[%s10 + $0x20] sm:$0xff]
        %v1577 = vld [vmem:[%s10 + $0x28] sm:$0xff]
        %v1578 = vld [vmem:[%s10 + $0x30] sm:$0xff]
        %v1579 = vld [vmem:[%s10 + $0x38] sm:$0xff]
        %1581 = vset.pattern.permute.xlu0 0
        %1582 = vperm.xlu0 %1581, %v1572
        %v1583 = vpop.permute.xlu0 %1582
        %1586 = vset.pattern.permute.xlu0 0
        %1587 = vperm.xlu0 %1586, %v1573
        %v1588 = vpop.permute.xlu0 %1587
        %1591 = vset.pattern.permute.xlu0 0
        %1592 = vperm.xlu0 %1591, %v1574
        %v1593 = vpop.permute.xlu0 %1592
        %1596 = vset.pattern.permute.xlu0 0
        %1597 = vperm.xlu0 %1596, %v1575
        %v1598 = vpop.permute.xlu0 %1597
        %1601 = vset.pattern.permute.xlu0 0
        %1602 = vperm.xlu0 %1601, %v1576
        %v1603 = vpop.permute.xlu0 %1602
        %1606 = vset.pattern.permute.xlu0 0
        %1607 = vperm.xlu0 %1606, %v1577
        %v1608 = vpop.permute.xlu0 %1607
        %1611 = vset.pattern.permute.xlu0 0
        %1612 = vperm.xlu0 %1611, %v1578
        %v1613 = vpop.permute.xlu0 %1612
        %1616 = vset.pattern.permute.xlu0 0
        %1617 = vperm.xlu0 %1616, %v1579
        %v1618 = vpop.permute.xlu0 %1617
        %1620 = vmatprep.subr.mxu0 0.0
        %1621 = vmatpush1.msra.mxu0 %v1524
        %1622 = vmatprep.subr.mxu0 0.0
        %1623 = vmatpush1.msra.mxu0 %v1525
        %1624 = vmatprep.subr.mxu0 0.0
        %1625 = vmatpush1.msra.mxu0 %v1526
        %1626 = vmatprep.subr.mxu0 0.0
        %1627 = vmatpush1.msra.mxu0 %v1527
        %1628 = vmatprep.subr.mxu0 0.0
        %1629 = vmatpush1.msra.mxu0 %v1528
        %1630 = vmatprep.subr.mxu0 0.0
        %1631 = vmatpush1.msra.mxu0 %v1529
        %1632 = vmatprep.subr.mxu0 0.0
        %1633 = vmatpush1.msra.mxu0 %v1530
        %1634 = vmatprep.subr.mxu0 0.0
        %1635 = vmatpush1.msra.mxu0 %v1531
        %1636 = vmatprep.subr.mxu0 0.0
        %1637 = vmatpush1.msra.mxu0 %v1532
        %1638 = vmatprep.subr.mxu0 0.0
        %1639 = vmatpush1.msra.mxu0 %v1533
        %1640 = vmatprep.subr.mxu0 0.0
        %1641 = vmatpush1.msra.mxu0 %v1534
        %1642 = vmatprep.subr.mxu0 0.0
        %1643 = vmatpush1.msra.mxu0 %v1535
        %1644 = vmatprep.subr.mxu0 0.0
        %1645 = vmatpush1.msra.mxu0 %v1536
        %1646 = vmatprep.subr.mxu0 0.0
        %1647 = vmatpush1.msra.mxu0 %v1537
        %1648 = vmatprep.subr.mxu0 0.0
        %1649 = vmatpush1.msra.mxu0 %v1538
        %1650 = vmatprep.subr.mxu0 0.0
        %1651 = vmatpush1.msra.mxu0 %v1539
        %1652 = vmatprep.subr.mxu0 0.0
        %1653 = vmatpush1.msra.mxu0 %v1540
        %1654 = vmatprep.subr.mxu0 0.0
        %1655 = vmatpush1.msra.mxu0 %v1541
        %1656 = vmatprep.subr.mxu0 0.0
        %1657 = vmatpush1.msra.mxu0 %v1542
        %1658 = vmatprep.subr.mxu0 0.0
        %1659 = vmatpush1.msra.mxu0 %v1543
        %1660 = vmatprep.subr.mxu0 0.0
        %1661 = vmatpush1.msra.mxu0 %v1544
        %1662 = vmatprep.subr.mxu0 0.0
        %1663 = vmatpush1.msra.mxu0 %v1545
        %1664 = vmatprep.subr.mxu0 0.0
        %1665 = vmatpush1.msra.mxu0 %v1546
        %1666 = vmatprep.subr.mxu0 0.0
        %1667 = vmatpush1.msra.mxu0 %v1547
        %1668 = vmatprep.subr.mxu0 0.0
        %1669 = vmatpush1.msra.mxu0 %v1548
        %1670 = vmatprep.subr.mxu0 0.0
        %1671 = vmatpush1.msra.mxu0 %v1549
        %1672 = vmatprep.subr.mxu0 0.0
        %1673 = vmatpush1.msra.mxu0 %v1550
        %1674 = vmatprep.subr.mxu0 0.0
        %1675 = vmatpush1.msra.mxu0 %v1551
        %1676 = vmatprep.subr.mxu0 0.0
        %1677 = vmatpush1.msra.mxu0 %v1552
        %1678 = vmatprep.subr.mxu0 0.0
        %1679 = vmatpush1.msra.mxu0 %v1553
        %1680 = vmatprep.subr.mxu0 0.0
        %1681 = vmatpush1.msra.mxu0 %v1554
        %1682 = vmatprep.subr.mxu0 0.0
        %1683 = vmatpush1.msra.mxu0 %v1555
        %1684 = vmatprep.mubr.f32.mxu0 %v1557
        %1685 = vmatmul.mubr.f32.gmra.mrb[0].mxu0 %v1556
        %v1686 = vpop.f32.mrb[0].mxu0
        %v1687 = vadd.f32 %v1583, %v1686
        %v1688 = vpop.f32.mrb[0].mxu0
        %1689 = vmatprep.mubr.f32.mxu0 %v1559
        %1690 = vmatmul.mubr.f32.gmra.mrb[0].mxu0 %v1558
        %v1691 = vpop.f32.mrb[0].mxu0
        %v1692 = vadd.f32 %v1588, %v1691
        %v1693 = vpop.f32.mrb[0].mxu0
        %1694 = vmatprep.mubr.f32.mxu0 %v1561
        %1695 = vmatmul.mubr.f32.gmra.mrb[0].mxu0 %v1560
        %v1696 = vpop.f32.mrb[0].mxu0
        %v1697 = vadd.f32 %v1593, %v1696
        %v1698 = vpop.f32.mrb[0].mxu0
        %1699 = vmatprep.mubr.f32.mxu0 %v1563
        %1700 = vmatmul.mubr.f32.gmra.mrb[0].mxu0 %v1562
        %v1701 = vpop.f32.mrb[0].mxu0
        %v1702 = vadd.f32 %v1598, %v1701
        %v1703 = vpop.f32.mrb[0].mxu0
        %1704 = vmatprep.mubr.f32.mxu0 %v1565
        %1705 = vmatmul.mubr.f32.gmra.mrb[0].mxu0 %v1564
        %v1706 = vpop.f32.mrb[0].mxu0
        %v1707 = vadd.f32 %v1603, %v1706
        %v1708 = vpop.f32.mrb[0].mxu0
        %1709 = vmatprep.mubr.f32.mxu0 %v1567
        %1710 = vmatmul.mubr.f32.gmra.mrb[0].mxu0 %v1566
        %v1711 = vpop.f32.mrb[0].mxu0
        %v1712 = vadd.f32 %v1608, %v1711
        %v1713 = vpop.f32.mrb[0].mxu0
        %1714 = vmatprep.mubr.f32.mxu0 %v1569
        %1715 = vmatmul.mubr.f32.gmra.mrb[0].mxu0 %v1568
        %v1716 = vpop.f32.mrb[0].mxu0
        %v1717 = vadd.f32 %v1613, %v1716
        %v1718 = vpop.f32.mrb[0].mxu0
        %1719 = vmatprep.mubr.f32.mxu0 %v1571
        %1720 = vmatmul.mubr.f32.gmra.mrb[0].mxu0 %v1570
        %v1721 = vpop.f32.mrb[0].mxu0
        %v1722 = vadd.f32 %v1618, %v1721
        %v1723 = vpop.f32.mrb[0].mxu0
        %1724 = vdwg.mxu0
        %v1725 = vtanh.pop %v1687
        %v1726 = vtanh.pop %v1692
        %v1727 = vtanh.pop %v1697
        %v1728 = vtanh.pop %v1702
        %v1729 = vtanh.pop %v1707
        %v1730 = vtanh.pop %v1712
        %v1731 = vtanh.pop %v1717
        %v1732 = vtanh.pop %v1722
        %v1733 = vld [vmem:[%s11] sm:$0xff]
        %v1734 = vld [vmem:[%s11 + $0x8] sm:$0x1]
        %v1735 = vld [vmem:[%s12] sm:$0xff]
        %v1736 = vld [vmem:[%s12 + $0x8] sm:$0x1]
        %1738 = vset.pattern.permute.xlu0 0
        %1739 = vperm.xlu0 %1738, %v1735
        %v1740 = vpop.permute.xlu0 %1739
        %1743 = vset.pattern.permute.xlu0 0
        %1744 = vperm.xlu0 %1743, %v1736
        %v1745 = vpop.permute.xlu0 %1744
        %v1748 = vsel %vm1202, %v1733, 0
        %v1751 = vsel %vm1202, %v1734, 0
        %1753 = vmatprep.subr.mxu0 0.0
        %1754 = vmatpush1.msra.mxu0 %v1725
        %1755 = vmatprep.subr.mxu0 0.0
        %1756 = vmatpush1.msra.mxu0 %v1726
        %1757 = vmatprep.subr.mxu0 0.0
        %1758 = vmatpush1.msra.mxu0 %v1727
        %1759 = vmatprep.subr.mxu0 0.0
        %1760 = vmatpush1.msra.mxu0 %v1728
        %1761 = vmatprep.subr.mxu0 0.0
        %1762 = vmatpush1.msra.mxu0 %v1729
        %1763 = vmatprep.subr.mxu0 0.0
        %1764 = vmatpush1.msra.mxu0 %v1730
        %1765 = vmatprep.subr.mxu0 0.0
        %1766 = vmatpush1.msra.mxu0 %v1731
        %1767 = vmatprep.subr.mxu0 0.0
        %1768 = vmatpush1.msra.mxu0 %v1732
        %1769 = vmatprep.subr.mxu0 0.0
        %1770 = vmatpush1.msra.mxu0 0.0
        %1771 = vmatprep.subr.mxu0 0.0
        %1772 = vmatpush1.msra.mxu0 0.0
        %1773 = vmatprep.subr.mxu0 0.0
        %1774 = vmatpush1.msra.mxu0 0.0
        %1775 = vmatprep.subr.mxu0 0.0
        %1776 = vmatpush1.msra.mxu0 0.0
        %1777 = vmatprep.subr.mxu0 0.0
        %1778 = vmatpush1.msra.mxu0 0.0
        %1779 = vmatprep.subr.mxu0 0.0
        %1780 = vmatpush1.msra.mxu0 0.0
        %1781 = vmatprep.subr.mxu0 0.0
        %1782 = vmatpush1.msra.mxu0 0.0
        %1783 = vmatprep.subr.mxu0 0.0
        %1784 = vmatpush1.msra.mxu0 0.0
        %1785 = vmatprep.subr.mxu0 0.0
        %1786 = vmatpush1.msra.mxu0 0.0
        %1787 = vmatprep.subr.mxu0 0.0
        %1788 = vmatpush1.msra.mxu0 0.0
        %1789 = vmatprep.subr.mxu0 0.0
        %1790 = vmatpush1.msra.mxu0 0.0
        %1791 = vmatprep.subr.mxu0 0.0
        %1792 = vmatpush1.msra.mxu0 0.0
        %1793 = vmatprep.subr.mxu0 0.0
        %1794 = vmatpush1.msra.mxu0 0.0
        %1795 = vmatprep.subr.mxu0 0.0
        %1796 = vmatpush1.msra.mxu0 0.0
        %1797 = vmatprep.subr.mxu0 0.0
        %1798 = vmatpush1.msra.mxu0 0.0
        %1799 = vmatprep.subr.mxu0 0.0
        %1800 = vmatpush1.msra.mxu0 0.0
        %1801 = vmatprep.subr.mxu0 0.0
        %1802 = vmatpush1.msra.mxu0 0.0
        %1803 = vmatprep.subr.mxu0 0.0
        %1804 = vmatpush1.msra.mxu0 0.0
        %1805 = vmatprep.subr.mxu0 0.0
        %1806 = vmatpush1.msra.mxu0 0.0
        %1807 = vmatprep.subr.mxu0 0.0
        %1808 = vmatpush1.msra.mxu0 0.0
        %1809 = vmatprep.subr.mxu0 0.0
        %1810 = vmatpush1.msra.mxu0 0.0
        %1811 = vmatprep.subr.mxu0 0.0
        %1812 = vmatpush1.msra.mxu0 0.0
        %1813 = vmatprep.subr.mxu0 0.0
        %1814 = vmatpush1.msra.mxu0 0.0
        %1815 = vmatprep.subr.mxu0 0.0
        %1816 = vmatpush1.msra.mxu0 0.0
        %1817 = vmatprep.mubr.f32.mxu0 0.0
        %1818 = vmatmul.mubr.f32.gmra.mrb[0].mxu0 %v1748
        %v1819 = vpop.f32.mrb[0].mxu0
        %v1820 = vadd.f32 %v1740, %v1819
        %v1821 = vpop.f32.mrb[0].mxu0
        %1822 = vmatprep.mubr.f32.mxu0 0.0
        %1823 = vmatmul.mubr.f32.gmra.mrb[0].mxu0 %v1751
        %v1824 = vpop.f32.mrb[0].mxu0
        %v1825 = vadd.f32 %v1745, %v1824
        %v1826 = vpop.f32.mrb[0].mxu0
        %1827 = vdwg.mxu0
        %v1828 = vtanh.pop %v1820
        %v1829 = vtanh.pop %v1825
        %v1830 = vld [vmem:[%s13] sm:$0x1]
        %v1831 = vld [vmem:[#allocation2] sm:$0x1]
        %1833 = vset.pattern.permute.xlu0 0
        %1834 = vperm.xlu0 %1833, %v1830
        %v1835 = vpop.permute.xlu0 %1834
        %v1837 = vlaneseq
        %v1838 = vshrl.u32 %v1837, 7
        %v1839 = vsub.s32 0, %v1838
        %v1840 = vrot.slane %v1835, %v1839
        %v1841 = vmul.f32 %v1840, %v1828
        %1842 = vset.pattern.permute.xlu0 1
        %1843 = vperm.xlu0 %1842, %v1830
        %v1844 = vpop.permute.xlu0 %1843
        %v1846 = vlaneseq
        %v1847 = vshrl.u32 %v1846, 7
        %v1848 = vsub.s32 0, %v1847
        %v1849 = vrot.slane %v1844, %v1848
        %v1850 = vmul.f32 %v1849, %v1828
        %v1852 = vrot.slane %v1850, 1
        %v1854 = vadd.f32 %v1841, %v1852
        %1855 = vset.pattern.permute.xlu0 2
        %1856 = vperm.xlu0 %1855, %v1830
        %v1857 = vpop.permute.xlu0 %1856
        %v1859 = vlaneseq
        %v1860 = vshrl.u32 %v1859, 7
        %v1861 = vsub.s32 0, %v1860
        %v1862 = vrot.slane %v1857, %v1861
        %v1863 = vmul.f32 %v1862, %v1828
        %v1865 = vrot.slane %v1863, 2
        %v1867 = vadd.f32 %v1854, %v1865
        %1868 = vset.pattern.permute.xlu0 3
        %1869 = vperm.xlu0 %1868, %v1830
        %v1870 = vpop.permute.xlu0 %1869
        %v1872 = vlaneseq
        %v1873 = vshrl.u32 %v1872, 7
        %v1874 = vsub.s32 0, %v1873
        %v1875 = vrot.slane %v1870, %v1874
        %v1876 = vmul.f32 %v1875, %v1828
        %v1878 = vrot.slane %v1876, 3
        %v1880 = vadd.f32 %v1867, %v1878
        %1881 = vset.pattern.permute.xlu0 4
        %1882 = vperm.xlu0 %1881, %v1830
        %v1883 = vpop.permute.xlu0 %1882
        %v1885 = vlaneseq
        %v1886 = vshrl.u32 %v1885, 7
        %v1887 = vsub.s32 0, %v1886
        %v1888 = vrot.slane %v1883, %v1887
        %v1889 = vmul.f32 %v1888, %v1828
        %v1891 = vrot.slane %v1889, 4
        %v1893 = vadd.f32 %v1880, %v1891
        %1894 = vset.pattern.permute.xlu0 5
        %1895 = vperm.xlu0 %1894, %v1830
        %v1896 = vpop.permute.xlu0 %1895
        %v1898 = vlaneseq
        %v1899 = vshrl.u32 %v1898, 7
        %v1900 = vsub.s32 0, %v1899
        %v1901 = vrot.slane %v1896, %v1900
        %v1902 = vmul.f32 %v1901, %v1828
        %v1904 = vrot.slane %v1902, 5
        %v1906 = vadd.f32 %v1893, %v1904
        %1907 = vset.pattern.permute.xlu0 6
        %1908 = vperm.xlu0 %1907, %v1830
        %v1909 = vpop.permute.xlu0 %1908
        %v1911 = vlaneseq
        %v1912 = vshrl.u32 %v1911, 7
        %v1913 = vsub.s32 0, %v1912
        %v1914 = vrot.slane %v1909, %v1913
        %v1915 = vmul.f32 %v1914, %v1828
        %v1917 = vrot.slane %v1915, 6
        %v1919 = vadd.f32 %v1906, %v1917
        %1920 = vset.pattern.permute.xlu0 7
        %1921 = vperm.xlu0 %1920, %v1830
        %v1922 = vpop.permute.xlu0 %1921
        %v1924 = vlaneseq
        %v1925 = vshrl.u32 %v1924, 7
        %v1926 = vsub.s32 0, %v1925
        %v1927 = vrot.slane %v1922, %v1926
        %v1928 = vmul.f32 %v1927, %v1828
        %v1930 = vrot.slane %v1928, 7
        %v1932 = vadd.f32 %v1919, %v1930
        %1933 = vset.pattern.permute.xlu0 8
        %1934 = vperm.xlu0 %1933, %v1830
        %v1935 = vpop.permute.xlu0 %1934
        %v1937 = vlaneseq
        %v1938 = vshrl.u32 %v1937, 7
        %v1939 = vsub.s32 0, %v1938
        %v1940 = vrot.slane %v1935, %v1939
        %v1941 = vmul.f32 %v1940, %v1829
        %v1942 = vadd.f32 %v1932, %v1941
        %1944 = vset.pattern.permute.xlu0 0
        %1945 = vperm.xlu0 %1944, %v1831
        %v1946 = vpop.permute.xlu0 %1945
        %v1948 = vlaneseq
        %v1949 = vshrl.u32 %v1948, 7
        %v1950 = vsub.s32 0, %v1949
        %v1951 = vrot.slane %v1946, %v1950
        %v1952 = vadd.f32 %v1942, %v1951
        %1953 = vst [vmem:[%s501] sm:$0x1] %v1952
        %s1954 = sand.u32 %s359, 1
        %s1955 = scalar_lea.sflag [#allocation4], %s1954
        %s1956 = sand.u32 %s359, 1
        %s1957 = scalar_lea.vmem [#allocation3], %s1956
        // Predicated region
        $region81: #{tpu_custom_call.1} parent=79 // pred_check
          %p1958 = pneg %p369
        $region82: #{tpu_custom_call.1} parent=79 // pred_check_branch
          %1960 = sbr.rel (%p1958) target = $region84
        $region83: #{tpu_custom_call.1} parent=79 // pred_region
          %s1962 = ssub.s32 16, 16
          %1963 = vsyncadd %s1955, %s1962
          %s1964 = smul.addr %s31, 16
          %s1965 = scalar_lea.hbm %s15, %s1964
          %s1967 = sshll.u32 %s1957, 4
          %s1968 = int_to_ptr.vmem [resolvable:$true] %s1967
          %1970 = dma.vmem_to_hbm [thread:$0]  %s1968, 16, %s1965, %s1955
        $region84: #{tpu_custom_call.1} parent=79 // pred_fallthru
          _
      $region80: #{tpu_custom_call.1} parent=5 // pred_fallthru
        _
      %p1971 = scmp.le.s32.totalorder 2, %s26
      // Predicated region
      $region85: #{tpu_custom_call.1} parent=5 // pred_check
        %p1972 = pneg %p1971
      $region86: #{tpu_custom_call.1} parent=5 // pred_check_branch
        %1974 = sbr.rel (%p1972) target = $region88
      $region87: #{tpu_custom_call.1} parent=5 // pred_region
        %s1975 = ssub.s32 %s26, 2
        // Predicated region
        $region89: #{tpu_custom_call.1} parent=87 // pred_check
          %p1976 = pneg %p375
        $region90: #{tpu_custom_call.1} parent=87 // pred_check_branch
          %1978 = sbr.rel (%p1976) target = $region92
        $region91: #{tpu_custom_call.1} parent=87 // pred_region
          %s1979 = sand.u32 %s360, 1
          %s1980 = scalar_lea.sflag [#allocation4], %s1979
          %s1981 = sand.u32 %s360, 1
          %s1982 = scalar_lea.vmem [#allocation3], %s1981
          %1983 = dma.done %s1980, 16
        $region92: #{tpu_custom_call.1} parent=87 // pred_fallthru
          _
      $region88: #{tpu_custom_call.1} parent=5 // pred_fallthru
        _
    $region6: #{tpu_custom_call.1} parent=1 // loop_footer
      %s30 = sadd.s32 1, %s26
    $region7: #{tpu_custom_call.1} parent=1 // loop_footer_branch
      %25 = sbr.rel target = $region3
    $region8: #{tpu_custom_call.1} parent=1 // loop_exit
      _
    %1984 = vsyncpa [#allocation4], 1
    %s1985 = scalar_lea.sflag [#allocation4], 1
    %1986 = vsyncpa %s1985, 1

</llo_original>
